<compile_context>
chip_gen: v7x
topology: tpu7x:2x2x1
jax: 0.10.0
libtpu: 0.0.40
codegen_flags: <defaults>
</compile_context>

<pallas_src>
import jax
import jax.numpy as jnp
from jax.experimental import pallas as pl
from jax.experimental.pallas import tpu as pltpu

LEAKY_SLOPE = 0.2
BN_EPS = 1e-5
DIL = 2            # dilation=2, kernel=3 -> 'same' padding of 2 per side
KH = KW = 3


def _bn_leaky_lanepacked(h, gamma_wc, beta_wc, c, n_px):
    """Training-mode BatchNorm2d (biased variance over N*H*W) + LeakyReLU(0.2) on a
    lane-packed (rows, W*C) f32 activation.  Per-channel stats are folded over the W
    lane-groups with a (WC, WC) 0/1 projection matmul (proj[i, j] = [i%C == j%C]),
    which also broadcasts them straight back to the lane-packed layout."""
    wc = h.shape[-1]
    ii = jax.lax.broadcasted_iota(jnp.int32, (wc, wc), 0)
    jj = jax.lax.broadcasted_iota(jnp.int32, (wc, wc), 1)
    proj = ((ii % c) == (jj % c)).astype(jnp.float32)

    inv_n = 1.0 / n_px
    s = jnp.sum(h, axis=0, keepdims=True)                       # (1, WC)
    ss = jnp.sum(h * h, axis=0, keepdims=True)                  # (1, WC)
    mean = jnp.dot(s, proj, preferred_element_type=jnp.float32) * inv_n
    ex2 = jnp.dot(ss, proj, preferred_element_type=jnp.float32) * inv_n
    var = jnp.maximum(ex2 - mean * mean, 0.0)
    y = (h - mean) * jax.lax.rsqrt(var + BN_EPS) * gamma_wc + beta_wc
    return jnp.where(y > 0, y, LEAKY_SLOPE * y)


def _make_kernel(N, H, W, Cin, Cmid, Cout):
    NH = N * H
    n_px = float(N * H * W)

    def kernel(xpad_ref, w1_ref, w2_ref, g1_ref, be1_ref, g2_ref, be2_ref,
               o_ref, hpad_ref):
        # ---- conv1: 3 banded bf16 MXU matmuls (one per ky row-tap) ------------
        acc1 = jnp.zeros((NH, W * Cmid), jnp.float32)
        for ky in range(KH):
            win = xpad_ref[:, ky * DIL: ky * DIL + H, :].reshape(NH, W * Cin)
            acc1 = acc1 + jnp.dot(win.astype(jnp.bfloat16), w1_ref[ky],
                                  preferred_element_type=jnp.float32)
        y1 = _bn_leaky_lanepacked(acc1, g1_ref[...], be1_ref[...], Cmid, n_px)

        # ---- stage y1 (bf16) with an H halo; zero ONLY the 2+2 halo rows ------
        hpad_ref[:, :DIL, :] = jnp.zeros((N, DIL, W * Cmid), jnp.bfloat16)
        hpad_ref[:, DIL + H:, :] = jnp.zeros((N, DIL, W * Cmid), jnp.bfloat16)
        hpad_ref[:, DIL:DIL + H, :] = y1.reshape(N, H, W * Cmid).astype(jnp.bfloat16)

        # ---- conv2: 3 banded bf16 MXU matmuls ---------------------------------
        acc2 = jnp.zeros((NH, W * Cout), jnp.float32)
        for ky in range(KH):
            win = hpad_ref[:, ky * DIL: ky * DIL + H, :].reshape(NH, W * Cmid)
            acc2 = acc2 + jnp.dot(win, w2_ref[ky],
                                  preferred_element_type=jnp.float32)
        y2 = _bn_leaky_lanepacked(acc2, g2_ref[...], be2_ref[...], Cout, n_px)

        # lane-dense (N*H, W*Cout) slab -> unmasked full-lane stores
        o_ref[...] = y2.astype(o_ref.dtype)

    return kernel


def _banded_tap_weights(w, width, dil):
    """(kh, kw, Cin, Cout) conv weight -> (kh, width*Cin, width*Cout).
    The kx taps and the W-direction 'same' zero padding are folded into a banded
    block matrix, so the in-kernel conv is just kh lane-packed matmuls."""
    kh, kw, cin, cout = w.shape
    wo = jnp.arange(width)
    wi_need = wo[None, :] + (jnp.arange(kw)[:, None] - (kw // 2)) * dil    # (kw, Wo)
    valid = (wi_need >= 0) & (wi_need < width)                             # (kw, Wo)
    sel = ((jnp.arange(width)[None, :, None] == wi_need[:, None, :])
           & valid[:, None, :]).astype(w.dtype)                            # (kw, Wi, Wo)
    big = jnp.einsum("xio,yxcm->yicom", sel, w)                            # (kh,Wi,Cin,Wo,Cout)
    return big.reshape(kh, width * cin, width * cout)


def double_dilated_conv(x_nchw, params):
    """Forward pass of DoubleDilatedConv (wgan=False, act=LeakyReLU(0.2))."""
    N, Cin, H, W = x_nchw.shape
    Cmid = params["g1"].shape[0]
    Cout = params["g2"].shape[0]

    # NCHW (module interface) -> lane-packed rows (N, H+2*DIL, W*Cin).  The transpose
    # is mandated by the NCHW interface; the H-halo pad fuses into that same XLA
    # relayout, and W-direction padding lives in the banded weights, so the
    # activation makes exactly one HBM round trip into the kernel.
    x_rows = jnp.transpose(x_nchw, (0, 2, 3, 1)).reshape(N, H, W * Cin)
    xpad = jnp.pad(x_rows, ((0, 0), (DIL, DIL), (0, 0)))

    # bf16 MXU operands (f32 accumulation inside the kernel).
    w1b = _banded_tap_weights(params["w1"], W, DIL).astype(jnp.bfloat16)
    w2b = _banded_tap_weights(params["w2"], W, DIL).astype(jnp.bfloat16)
    # conv biases are intentionally NOT passed: a per-channel constant added before
    # training-mode BatchNorm cancels exactly.
    g1 = jnp.tile(params["g1"], W).reshape(1, W * Cmid)
    be1 = jnp.tile(params["be1"], W).reshape(1, W * Cmid)
    g2 = jnp.tile(params["g2"], W).reshape(1, W * Cout)
    be2 = jnp.tile(params["be2"], W).reshape(1, W * Cout)

    flops = 2 * N * H * W * KH * KW * (Cin * Cmid + Cmid * Cout)
    bytes_accessed = (xpad.size * 4 + N * H * W * Cout * 4
                      + w1b.size * 2 + w2b.size * 2
                      + (g1.size + be1.size + g2.size + be2.size) * 4)

    out_rows = pl.pallas_call(
        _make_kernel(N, H, W, Cin, Cmid, Cout),
        out_shape=jax.ShapeDtypeStruct((N * H, W * Cout), x_nchw.dtype),
        scratch_shapes=[pltpu.VMEM((N, H + 2 * DIL, W * Cmid), jnp.bfloat16)],
        compiler_params=pltpu.CompilerParams(vmem_limit_bytes=32 * 1024 * 1024),
        cost_estimate=pl.CostEstimate(flops=flops, transcendentals=0,
                                      bytes_accessed=bytes_accessed),
    )(xpad, w1b, w2b, g1, be1, g2, be2)

    # lane-dense slab -> NCHW module output
    return jnp.transpose(out_rows.reshape(N, H, W, Cout), (0, 3, 1, 2))


# ----------------------------------------------------------------------------
# Parameter init (PyTorch-default-like: U(-1/sqrt(fan_in), 1/sqrt(fan_in)),
# Conv2d bias=True, BatchNorm weight=1 / bias=0).
# ----------------------------------------------------------------------------
def _conv_params(key, cin, cout):
    kw_, kb = jax.random.split(key)
    bound = 1.0 / (cin * KH * KW) ** 0.5
    w = jax.random.uniform(kw_, (KH, KW, cin, cout), jnp.float32, -bound, bound)
    b = jax.random.uniform(kb, (cout,), jnp.float32, -bound, bound)
    return w, b


def init_params(key, in_channels, out_channels, mid_channels=None):
    mid = mid_channels if mid_channels else out_channels
    k1, k2 = jax.random.split(key)
    w1, b1 = _conv_params(k1, in_channels, mid)
    w2, b2 = _conv_params(k2, mid, out_channels)
    return dict(
        w1=w1, b1=b1,   # b1/b2 kept for parity with nn.Conv2d(bias=True) but unused
        w2=w2, b2=b2,   # in the kernel: they cancel in training-mode BatchNorm.
        g1=jnp.ones((mid,), jnp.float32), be1=jnp.zeros((mid,), jnp.float32),
        g2=jnp.ones((out_channels,), jnp.float32),
        be2=jnp.zeros((out_channels,), jnp.float32),
    )


if __name__ == "__main__":
    N, C_IN, C_OUT, H, W = 2, 4, 8, 16, 16
    key = jax.random.PRNGKey(0)
    kx, kp = jax.random.split(key)

    x = jax.random.normal(kx, (N, C_IN, H, W), jnp.float32)
    params = init_params(kp, C_IN, C_OUT)   # mid_channels defaults to out_channels

    out = jax.jit(double_dilated_conv)(x, params)
    out = jax.block_until_ready(out)

    assert out.shape == (N, C_OUT, H, W), out.shape
    assert bool(jnp.all(jnp.isfinite(out)))
    print("KERNEL_OK")
</pallas_src>

<mosaic_0001>
module attributes {stable_mosaic.version = 11 : i64} {
  func.func @kernel(%arg0: memref<2x20x64xf32, #tpu.memory_space<vmem>>, %arg1: memref<3x64x128xbf16, #tpu.memory_space<vmem>>, %arg2: memref<3x128x128xbf16, #tpu.memory_space<vmem>>, %arg3: memref<1x128xf32, #tpu.memory_space<vmem>>, %arg4: memref<1x128xf32, #tpu.memory_space<vmem>>, %arg5: memref<1x128xf32, #tpu.memory_space<vmem>>, %arg6: memref<1x128xf32, #tpu.memory_space<vmem>>, %arg7: memref<32x128xf32, #tpu.memory_space<vmem>>, %arg8: memref<2x20x128xbf16, #tpu.memory_space<vmem>>) attributes {dimension_semantics = [], scalar_prefetch = 0 : i64, scratch_operands = 1 : i64, tpu.core_type = #tpu.core_type<tc>} {
    %cst = arith.constant 0.000000e+00 : f32
    %0 = vector.broadcast %cst : f32 to vector<32x128xf32>
    %c0 = arith.constant 0 : index
    %c0_0 = arith.constant 0 : index
    %c0_1 = arith.constant 0 : index
    %1 = vector.load %arg0[%c0, %c0_0, %c0_1] : memref<2x20x64xf32, #tpu.memory_space<vmem>>, vector<2x16x64xf32>
    %2 = vector.shape_cast %1 : vector<2x16x64xf32> to vector<32x64xf32>
    %3 = arith.truncf %2 : vector<32x64xf32> to vector<32x64xbf16>
    %c0_2 = arith.constant 0 : index
    %c0_3 = arith.constant 0 : index
    %c0_4 = arith.constant 0 : index
    %4 = vector.load %arg1[%c0_2, %c0_3, %c0_4] : memref<3x64x128xbf16, #tpu.memory_space<vmem>>, vector<1x64x128xbf16>
    %5 = vector.shape_cast %4 : vector<1x64x128xbf16> to vector<64x128xbf16>
    %cst_5 = arith.constant dense<0.000000e+00> : vector<32x128xf32>
    %6 = tpu.matmul %3, %5, %cst_5 {dimension_numbers = #tpu.dot_dimension_numbers<[1], [0], [0], [1], [0, 0, 1, 1], [], []>} : vector<32x64xbf16>, vector<64x128xbf16>, vector<32x128xf32> -> vector<32x128xf32>
    %7 = arith.addf %0, %6 : vector<32x128xf32>
    %c0_6 = arith.constant 0 : index
    %c2 = arith.constant 2 : index
    %c0_7 = arith.constant 0 : index
    %8 = vector.load %arg0[%c0_6, %c2, %c0_7] : memref<2x20x64xf32, #tpu.memory_space<vmem>>, vector<2x16x64xf32>
    %9 = vector.shape_cast %8 : vector<2x16x64xf32> to vector<32x64xf32>
    %10 = arith.truncf %9 : vector<32x64xf32> to vector<32x64xbf16>
    %c1 = arith.constant 1 : index
    %c0_8 = arith.constant 0 : index
    %c0_9 = arith.constant 0 : index
    %11 = vector.load %arg1[%c1, %c0_8, %c0_9] : memref<3x64x128xbf16, #tpu.memory_space<vmem>>, vector<1x64x128xbf16>
    %12 = vector.shape_cast %11 : vector<1x64x128xbf16> to vector<64x128xbf16>
    %cst_10 = arith.constant dense<0.000000e+00> : vector<32x128xf32>
    %13 = tpu.matmul %10, %12, %cst_10 {dimension_numbers = #tpu.dot_dimension_numbers<[1], [0], [0], [1], [0, 0, 1, 1], [], []>} : vector<32x64xbf16>, vector<64x128xbf16>, vector<32x128xf32> -> vector<32x128xf32>
    %14 = arith.addf %7, %13 : vector<32x128xf32>
    %c0_11 = arith.constant 0 : index
    %c4 = arith.constant 4 : index
    %c0_12 = arith.constant 0 : index
    %15 = vector.load %arg0[%c0_11, %c4, %c0_12] : memref<2x20x64xf32, #tpu.memory_space<vmem>>, vector<2x16x64xf32>
    %16 = vector.shape_cast %15 : vector<2x16x64xf32> to vector<32x64xf32>
    %17 = arith.truncf %16 : vector<32x64xf32> to vector<32x64xbf16>
    %c2_13 = arith.constant 2 : index
    %c0_14 = arith.constant 0 : index
    %c0_15 = arith.constant 0 : index
    %18 = vector.load %arg1[%c2_13, %c0_14, %c0_15] : memref<3x64x128xbf16, #tpu.memory_space<vmem>>, vector<1x64x128xbf16>
    %19 = vector.shape_cast %18 : vector<1x64x128xbf16> to vector<64x128xbf16>
    %cst_16 = arith.constant dense<0.000000e+00> : vector<32x128xf32>
    %20 = tpu.matmul %17, %19, %cst_16 {dimension_numbers = #tpu.dot_dimension_numbers<[1], [0], [0], [1], [0, 0, 1, 1], [], []>} : vector<32x64xbf16>, vector<64x128xbf16>, vector<32x128xf32> -> vector<32x128xf32>
    %21 = arith.addf %14, %20 : vector<32x128xf32>
    %c0_17 = arith.constant 0 : index
    %c0_18 = arith.constant 0 : index
    %22 = vector.load %arg3[%c0_17, %c0_18] : memref<1x128xf32, #tpu.memory_space<vmem>>, vector<1x128xf32>
    %c0_19 = arith.constant 0 : index
    %c0_20 = arith.constant 0 : index
    %23 = vector.load %arg4[%c0_19, %c0_20] : memref<1x128xf32, #tpu.memory_space<vmem>>, vector<1x128xf32>
    %24 = tpu.iota {dimensions = array<i32: 0>} : vector<128x128xi32>
    %25 = tpu.iota {dimensions = array<i32: 1>} : vector<128x128xi32>
    %c8_i32 = arith.constant 8 : i32
    %c0_i32 = arith.constant 0 : i32
    %26 = arith.cmpi eq, %c8_i32, %c0_i32 : i32
    %c1_i32 = arith.constant 1 : i32
    %27 = arith.select %26, %c1_i32, %c8_i32 : i32
    %28 = vector.broadcast %27 : i32 to vector<128x128xi32>
    %29 = arith.remsi %24, %28 : vector<128x128xi32>
    %c0_i32_21 = arith.constant 0 : i32
    %30 = vector.broadcast %c0_i32_21 : i32 to vector<128x128xi32>
    %31 = arith.cmpi ne, %29, %30 : vector<128x128xi32>
    %c0_i32_22 = arith.constant 0 : i32
    %32 = vector.broadcast %c0_i32_22 : i32 to vector<128x128xi32>
    %33 = arith.cmpi slt, %29, %32 : vector<128x128xi32>
    %c0_i32_23 = arith.constant 0 : i32
    %34 = arith.cmpi slt, %27, %c0_i32_23 : i32
    %35 = vector.broadcast %34 : i1 to vector<128x128xi1>
    %36 = vector.broadcast %35 : vector<128x128xi1> to vector<128x128xi1>
    %37 = arith.xori %33, %36 : vector<128x128xi1>
    %38 = arith.andi %37, %31 : vector<128x128xi1>
    %39 = vector.broadcast %27 : i32 to vector<128x128xi32>
    %40 = arith.addi %29, %39 : vector<128x128xi32>
    %41 = arith.select %38, %40, %29 : vector<128x128xi1>, vector<128x128xi32>
    %c8_i32_24 = arith.constant 8 : i32
    %c0_i32_25 = arith.constant 0 : i32
    %42 = arith.cmpi eq, %c8_i32_24, %c0_i32_25 : i32
    %c1_i32_26 = arith.constant 1 : i32
    %43 = arith.select %42, %c1_i32_26, %c8_i32_24 : i32
    %44 = vector.broadcast %43 : i32 to vector<128x128xi32>
    %45 = arith.remsi %25, %44 : vector<128x128xi32>
    %c0_i32_27 = arith.constant 0 : i32
    %46 = vector.broadcast %c0_i32_27 : i32 to vector<128x128xi32>
    %47 = arith.cmpi ne, %45, %46 : vector<128x128xi32>
    %c0_i32_28 = arith.constant 0 : i32
    %48 = vector.broadcast %c0_i32_28 : i32 to vector<128x128xi32>
    %49 = arith.cmpi slt, %45, %48 : vector<128x128xi32>
    %c0_i32_29 = arith.constant 0 : i32
    %50 = arith.cmpi slt, %43, %c0_i32_29 : i32
    %51 = vector.broadcast %50 : i1 to vector<128x128xi1>
    %52 = vector.broadcast %51 : vector<128x128xi1> to vector<128x128xi1>
    %53 = arith.xori %49, %52 : vector<128x128xi1>
    %54 = arith.andi %53, %47 : vector<128x128xi1>
    %55 = vector.broadcast %43 : i32 to vector<128x128xi32>
    %56 = arith.addi %45, %55 : vector<128x128xi32>
    %57 = arith.select %54, %56, %45 : vector<128x128xi1>, vector<128x128xi32>
    %58 = arith.cmpi eq, %41, %57 : vector<128x128xi32>
    %59 = arith.extui %58 : vector<128x128xi1> to vector<128x128xi32>
    %60 = arith.sitofp %59 : vector<128x128xi32> to vector<128x128xf32>
    %cst_30 = arith.constant dense<0.000000e+00> : vector<128xf32>
    %61 = vector.multi_reduction <add>, %21, %cst_30 [0] : vector<32x128xf32> to vector<128xf32>
    %62 = vector.shape_cast %61 : vector<128xf32> to vector<1x128xf32>
    %63 = arith.mulf %21, %21 : vector<32x128xf32>
    %cst_31 = arith.constant dense<0.000000e+00> : vector<128xf32>
    %64 = vector.multi_reduction <add>, %63, %cst_31 [0] : vector<32x128xf32> to vector<128xf32>
    %65 = vector.shape_cast %64 : vector<128xf32> to vector<1x128xf32>
    %cst_32 = arith.constant dense<0.000000e+00> : vector<1x128xf32>
    %66 = tpu.matmul %62, %60, %cst_32 {dimension_numbers = #tpu.dot_dimension_numbers<[1], [0], [0], [1], [0, 0, 1, 1], [], []>} : vector<1x128xf32>, vector<128x128xf32>, vector<1x128xf32> -> vector<1x128xf32>
    %cst_33 = arith.constant 0.001953125 : f32
    %67 = vector.broadcast %cst_33 : f32 to vector<1x128xf32>
    %68 = arith.mulf %66, %67 : vector<1x128xf32>
    %cst_34 = arith.constant dense<0.000000e+00> : vector<1x128xf32>
    %69 = tpu.matmul %65, %60, %cst_34 {dimension_numbers = #tpu.dot_dimension_numbers<[1], [0], [0], [1], [0, 0, 1, 1], [], []>} : vector<1x128xf32>, vector<128x128xf32>, vector<1x128xf32> -> vector<1x128xf32>
    %cst_35 = arith.constant 0.001953125 : f32
    %70 = vector.broadcast %cst_35 : f32 to vector<1x128xf32>
    %71 = arith.mulf %69, %70 : vector<1x128xf32>
    %72 = arith.mulf %68, %68 : vector<1x128xf32>
    %73 = arith.subf %71, %72 : vector<1x128xf32>
    %cst_36 = arith.constant 0.000000e+00 : f32
    %74 = vector.broadcast %cst_36 : f32 to vector<1x128xf32>
    %75 = arith.maximumf %73, %74 : vector<1x128xf32>
    %76 = vector.broadcast %68 : vector<1x128xf32> to vector<32x128xf32>
    %77 = arith.subf %21, %76 : vector<32x128xf32>
    %cst_37 = arith.constant 9.99999974E-6 : f32
    %78 = vector.broadcast %cst_37 : f32 to vector<1x128xf32>
    %79 = arith.addf %75, %78 : vector<1x128xf32>
    %80 = math.rsqrt %79 : vector<1x128xf32>
    %81 = vector.broadcast %80 : vector<1x128xf32> to vector<32x128xf32>
    %82 = arith.mulf %77, %81 : vector<32x128xf32>
    %83 = vector.broadcast %22 : vector<1x128xf32> to vector<32x128xf32>
    %84 = arith.mulf %82, %83 : vector<32x128xf32>
    %85 = vector.broadcast %23 : vector<1x128xf32> to vector<32x128xf32>
    %86 = arith.addf %84, %85 : vector<32x128xf32>
    %cst_38 = arith.constant 0.000000e+00 : f32
    %87 = vector.broadcast %cst_38 : f32 to vector<32x128xf32>
    %88 = arith.cmpf ogt, %86, %87 : vector<32x128xf32>
    %cst_39 = arith.constant 2.000000e-01 : f32
    %89 = vector.broadcast %cst_39 : f32 to vector<32x128xf32>
    %90 = arith.mulf %89, %86 : vector<32x128xf32>
    %91 = arith.select %88, %86, %90 : vector<32x128xi1>, vector<32x128xf32>
    %cst_40 = arith.constant 0.000000e+00 : bf16
    %92 = vector.broadcast %cst_40 : bf16 to vector<2x2x128xbf16>
    %c0_41 = arith.constant 0 : index
    %c0_42 = arith.constant 0 : index
    %c0_43 = arith.constant 0 : index
    %93 = vector.load %arg8[%c0_41, %c0_42, %c0_43] : memref<2x20x128xbf16, #tpu.memory_space<vmem>>, vector<2x2x128xbf16>
    tpu.vector_store %arg8[%c0_41, %c0_42, %c0_43], %92 {strides = array<i32>} : memref<2x20x128xbf16, #tpu.memory_space<vmem>>, vector<2x2x128xbf16>,
    %cst_44 = arith.constant 0.000000e+00 : bf16
    %94 = vector.broadcast %cst_44 : bf16 to vector<2x2x128xbf16>
    %c0_45 = arith.constant 0 : index
    %c18 = arith.constant 18 : index
    %c0_46 = arith.constant 0 : index
    %95 = vector.load %arg8[%c0_45, %c18, %c0_46] : memref<2x20x128xbf16, #tpu.memory_space<vmem>>, vector<2x2x128xbf16>
    tpu.vector_store %arg8[%c0_45, %c18, %c0_46], %94 {strides = array<i32>} : memref<2x20x128xbf16, #tpu.memory_space<vmem>>, vector<2x2x128xbf16>,
    %96 = vector.shape_cast %91 : vector<32x128xf32> to vector<2x16x128xf32>
    %97 = arith.truncf %96 : vector<2x16x128xf32> to vector<2x16x128xbf16>
    %c0_47 = arith.constant 0 : index
    %c2_48 = arith.constant 2 : index
    %c0_49 = arith.constant 0 : index
    %98 = vector.load %arg8[%c0_47, %c2_48, %c0_49] : memref<2x20x128xbf16, #tpu.memory_space<vmem>>, vector<2x16x128xbf16>
    tpu.vector_store %arg8[%c0_47, %c2_48, %c0_49], %97 {strides = array<i32>} : memref<2x20x128xbf16, #tpu.memory_space<vmem>>, vector<2x16x128xbf16>,
    %cst_50 = arith.constant 0.000000e+00 : f32
    %99 = vector.broadcast %cst_50 : f32 to vector<32x128xf32>
    %c0_51 = arith.constant 0 : index
    %c0_52 = arith.constant 0 : index
    %c0_53 = arith.constant 0 : index
    %100 = vector.load %arg8[%c0_51, %c0_52, %c0_53] : memref<2x20x128xbf16, #tpu.memory_space<vmem>>, vector<2x16x128xbf16>
    %101 = vector.shape_cast %100 : vector<2x16x128xbf16> to vector<32x128xbf16>
    %c0_54 = arith.constant 0 : index
    %c0_55 = arith.constant 0 : index
    %c0_56 = arith.constant 0 : index
    %102 = vector.load %arg2[%c0_54, %c0_55, %c0_56] : memref<3x128x128xbf16, #tpu.memory_space<vmem>>, vector<1x128x128xbf16>
    %103 = vector.shape_cast %102 : vector<1x128x128xbf16> to vector<128x128xbf16>
    %cst_57 = arith.constant dense<0.000000e+00> : vector<32x128xf32>
    %104 = tpu.matmul %101, %103, %cst_57 {dimension_numbers = #tpu.dot_dimension_numbers<[1], [0], [0], [1], [0, 0, 1, 1], [], []>} : vector<32x128xbf16>, vector<128x128xbf16>, vector<32x128xf32> -> vector<32x128xf32>
    %105 = arith.addf %99, %104 : vector<32x128xf32>
    %c0_58 = arith.constant 0 : index
    %c2_59 = arith.constant 2 : index
    %c0_60 = arith.constant 0 : index
    %106 = vector.load %arg8[%c0_58, %c2_59, %c0_60] : memref<2x20x128xbf16, #tpu.memory_space<vmem>>, vector<2x16x128xbf16>
    %107 = vector.shape_cast %106 : vector<2x16x128xbf16> to vector<32x128xbf16>
    %c1_61 = arith.constant 1 : index
    %c0_62 = arith.constant 0 : index
    %c0_63 = arith.constant 0 : index
    %108 = vector.load %arg2[%c1_61, %c0_62, %c0_63] : memref<3x128x128xbf16, #tpu.memory_space<vmem>>, vector<1x128x128xbf16>
    %109 = vector.shape_cast %108 : vector<1x128x128xbf16> to vector<128x128xbf16>
    %cst_64 = arith.constant dense<0.000000e+00> : vector<32x128xf32>
    %110 = tpu.matmul %107, %109, %cst_64 {dimension_numbers = #tpu.dot_dimension_numbers<[1], [0], [0], [1], [0, 0, 1, 1], [], []>} : vector<32x128xbf16>, vector<128x128xbf16>, vector<32x128xf32> -> vector<32x128xf32>
    %111 = arith.addf %105, %110 : vector<32x128xf32>
    %c0_65 = arith.constant 0 : index
    %c4_66 = arith.constant 4 : index
    %c0_67 = arith.constant 0 : index
    %112 = vector.load %arg8[%c0_65, %c4_66, %c0_67] : memref<2x20x128xbf16, #tpu.memory_space<vmem>>, vector<2x16x128xbf16>
    %113 = vector.shape_cast %112 : vector<2x16x128xbf16> to vector<32x128xbf16>
    %c2_68 = arith.constant 2 : index
    %c0_69 = arith.constant 0 : index
    %c0_70 = arith.constant 0 : index
    %114 = vector.load %arg2[%c2_68, %c0_69, %c0_70] : memref<3x128x128xbf16, #tpu.memory_space<vmem>>, vector<1x128x128xbf16>
    %115 = vector.shape_cast %114 : vector<1x128x128xbf16> to vector<128x128xbf16>
    %cst_71 = arith.constant dense<0.000000e+00> : vector<32x128xf32>
    %116 = tpu.matmul %113, %115, %cst_71 {dimension_numbers = #tpu.dot_dimension_numbers<[1], [0], [0], [1], [0, 0, 1, 1], [], []>} : vector<32x128xbf16>, vector<128x128xbf16>, vector<32x128xf32> -> vector<32x128xf32>
    %117 = arith.addf %111, %116 : vector<32x128xf32>
    %c0_72 = arith.constant 0 : index
    %c0_73 = arith.constant 0 : index
    %118 = vector.load %arg5[%c0_72, %c0_73] : memref<1x128xf32, #tpu.memory_space<vmem>>, vector<1x128xf32>
    %c0_74 = arith.constant 0 : index
    %c0_75 = arith.constant 0 : index
    %119 = vector.load %arg6[%c0_74, %c0_75] : memref<1x128xf32, #tpu.memory_space<vmem>>, vector<1x128xf32>
    %120 = tpu.iota {dimensions = array<i32: 0>} : vector<128x128xi32>
    %121 = tpu.iota {dimensions = array<i32: 1>} : vector<128x128xi32>
    %c8_i32_76 = arith.constant 8 : i32
    %c0_i32_77 = arith.constant 0 : i32
    %122 = arith.cmpi eq, %c8_i32_76, %c0_i32_77 : i32
    %c1_i32_78 = arith.constant 1 : i32
    %123 = arith.select %122, %c1_i32_78, %c8_i32_76 : i32
    %124 = vector.broadcast %123 : i32 to vector<128x128xi32>
    %125 = arith.remsi %120, %124 : vector<128x128xi32>
    %c0_i32_79 = arith.constant 0 : i32
    %126 = vector.broadcast %c0_i32_79 : i32 to vector<128x128xi32>
    %127 = arith.cmpi ne, %125, %126 : vector<128x128xi32>
    %c0_i32_80 = arith.constant 0 : i32
    %128 = vector.broadcast %c0_i32_80 : i32 to vector<128x128xi32>
    %129 = arith.cmpi slt, %125, %128 : vector<128x128xi32>
    %c0_i32_81 = arith.constant 0 : i32
    %130 = arith.cmpi slt, %123, %c0_i32_81 : i32
    %131 = vector.broadcast %130 : i1 to vector<128x128xi1>
    %132 = vector.broadcast %131 : vector<128x128xi1> to vector<128x128xi1>
    %133 = arith.xori %129, %132 : vector<128x128xi1>
    %134 = arith.andi %133, %127 : vector<128x128xi1>
    %135 = vector.broadcast %123 : i32 to vector<128x128xi32>
    %136 = arith.addi %125, %135 : vector<128x128xi32>
    %137 = arith.select %134, %136, %125 : vector<128x128xi1>, vector<128x128xi32>
    %c8_i32_82 = arith.constant 8 : i32
    %c0_i32_83 = arith.constant 0 : i32
    %138 = arith.cmpi eq, %c8_i32_82, %c0_i32_83 : i32
    %c1_i32_84 = arith.constant 1 : i32
    %139 = arith.select %138, %c1_i32_84, %c8_i32_82 : i32
    %140 = vector.broadcast %139 : i32 to vector<128x128xi32>
    %141 = arith.remsi %121, %140 : vector<128x128xi32>
    %c0_i32_85 = arith.constant 0 : i32
    %142 = vector.broadcast %c0_i32_85 : i32 to vector<128x128xi32>
    %143 = arith.cmpi ne, %141, %142 : vector<128x128xi32>
    %c0_i32_86 = arith.constant 0 : i32
    %144 = vector.broadcast %c0_i32_86 : i32 to vector<128x128xi32>
    %145 = arith.cmpi slt, %141, %144 : vector<128x128xi32>
    %c0_i32_87 = arith.constant 0 : i32
    %146 = arith.cmpi slt, %139, %c0_i32_87 : i32
    %147 = vector.broadcast %146 : i1 to vector<128x128xi1>
    %148 = vector.broadcast %147 : vector<128x128xi1> to vector<128x128xi1>
    %149 = arith.xori %145, %148 : vector<128x128xi1>
    %150 = arith.andi %149, %143 : vector<128x128xi1>
    %151 = vector.broadcast %139 : i32 to vector<128x128xi32>
    %152 = arith.addi %141, %151 : vector<128x128xi32>
    %153 = arith.select %150, %152, %141 : vector<128x128xi1>, vector<128x128xi32>
    %154 = arith.cmpi eq, %137, %153 : vector<128x128xi32>
    %155 = arith.extui %154 : vector<128x128xi1> to vector<128x128xi32>
    %156 = arith.sitofp %155 : vector<128x128xi32> to vector<128x128xf32>
    %cst_88 = arith.constant dense<0.000000e+00> : vector<128xf32>
    %157 = vector.multi_reduction <add>, %117, %cst_88 [0] : vector<32x128xf32> to vector<128xf32>
    %158 = vector.shape_cast %157 : vector<128xf32> to vector<1x128xf32>
    %159 = arith.mulf %117, %117 : vector<32x128xf32>
    %cst_89 = arith.constant dense<0.000000e+00> : vector<128xf32>
    %160 = vector.multi_reduction <add>, %159, %cst_89 [0] : vector<32x128xf32> to vector<128xf32>
    %161 = vector.shape_cast %160 : vector<128xf32> to vector<1x128xf32>
    %cst_90 = arith.constant dense<0.000000e+00> : vector<1x128xf32>
    %162 = tpu.matmul %158, %156, %cst_90 {dimension_numbers = #tpu.dot_dimension_numbers<[1], [0], [0], [1], [0, 0, 1, 1], [], []>} : vector<1x128xf32>, vector<128x128xf32>, vector<1x128xf32> -> vector<1x128xf32>
    %cst_91 = arith.constant 0.001953125 : f32
    %163 = vector.broadcast %cst_91 : f32 to vector<1x128xf32>
    %164 = arith.mulf %162, %163 : vector<1x128xf32>
    %cst_92 = arith.constant dense<0.000000e+00> : vector<1x128xf32>
    %165 = tpu.matmul %161, %156, %cst_92 {dimension_numbers = #tpu.dot_dimension_numbers<[1], [0], [0], [1], [0, 0, 1, 1], [], []>} : vector<1x128xf32>, vector<128x128xf32>, vector<1x128xf32> -> vector<1x128xf32>
    %cst_93 = arith.constant 0.001953125 : f32
    %166 = vector.broadcast %cst_93 : f32 to vector<1x128xf32>
    %167 = arith.mulf %165, %166 : vector<1x128xf32>
    %168 = arith.mulf %164, %164 : vector<1x128xf32>
    %169 = arith.subf %167, %168 : vector<1x128xf32>
    %cst_94 = arith.constant 0.000000e+00 : f32
    %170 = vector.broadcast %cst_94 : f32 to vector<1x128xf32>
    %171 = arith.maximumf %169, %170 : vector<1x128xf32>
    %172 = vector.broadcast %164 : vector<1x128xf32> to vector<32x128xf32>
    %173 = arith.subf %117, %172 : vector<32x128xf32>
    %cst_95 = arith.constant 9.99999974E-6 : f32
    %174 = vector.broadcast %cst_95 : f32 to vector<1x128xf32>
    %175 = arith.addf %171, %174 : vector<1x128xf32>
    %176 = math.rsqrt %175 : vector<1x128xf32>
    %177 = vector.broadcast %176 : vector<1x128xf32> to vector<32x128xf32>
    %178 = arith.mulf %173, %177 : vector<32x128xf32>
    %179 = vector.broadcast %118 : vector<1x128xf32> to vector<32x128xf32>
    %180 = arith.mulf %178, %179 : vector<32x128xf32>
    %181 = vector.broadcast %119 : vector<1x128xf32> to vector<32x128xf32>
    %182 = arith.addf %180, %181 : vector<32x128xf32>
    %cst_96 = arith.constant 0.000000e+00 : f32
    %183 = vector.broadcast %cst_96 : f32 to vector<32x128xf32>
    %184 = arith.cmpf ogt, %182, %183 : vector<32x128xf32>
    %cst_97 = arith.constant 2.000000e-01 : f32
    %185 = vector.broadcast %cst_97 : f32 to vector<32x128xf32>
    %186 = arith.mulf %185, %182 : vector<32x128xf32>
    %187 = arith.select %184, %182, %186 : vector<32x128xi1>, vector<32x128xf32>
    %c0_98 = arith.constant 0 : index
    %c0_99 = arith.constant 0 : index
    %188 = vector.load %arg7[%c0_98, %c0_99] : memref<32x128xf32, #tpu.memory_space<vmem>>, vector<32x128xf32>
    tpu.vector_store %arg7[%c0_98, %c0_99], %187 {strides = array<i32>} : memref<32x128xf32, #tpu.memory_space<vmem>>, vector<32x128xf32>,
    return
  }
}

</mosaic_0001>

<llo_original>
// kernel: tile.23
$region0: #{tile.23}
  #allocation0 [shape = 's32[1]{0}', space=sflag, size = 0x4, scoped, tag = 'scoped memory for tile.23']
  %s0 = inlined_call_operand.vmem [shape: f32[8], index: 0, kind: input, shape index: {}]
  %s1 = inlined_call_operand.vmem [shape: f32[16,8], index: 1, kind: output, shape index: {}]
  // Predicated region
  $region2: #{tile.23} parent=0 // pred_check
    _
  $region3: #{tile.23} parent=0 // pred_check_branch
    %3 = sbr.rel (0) target = $region5
  $region4: #{tile.23} parent=0 // pred_region
    _
  $region5: #{tile.23} parent=0 // pred_fallthru
    _
  %v4 = vld [vmem:[%s0] ss:$0 sm:$0xff]
  %5 = vst [vmem:[%s1] sm:$0xff] %v4
  %s6 = scalar_lea.vmem %s1, 8
  %7 = vst [vmem:[%s6] sm:$0xff] %v4

// kernel: tile.24
$region0: #{tile.24}
  %s0 = inlined_call_operand.vmem [shape: f32[16,8], index: 0, kind: input, shape index: {}]
  %s1 = inlined_call_operand.vmem [shape: f32[1,128], index: 1, kind: output, shape index: {}]
  $region1: #{tile.24} parent=0
    #allocation0 [shape = 'u8[4096]{0}', space=vmem, size = 0x1000, scoped, tag = 'scoped mem for output reshape']
    %v2 = vld [vmem:[%s0] sm:$0x1]
    %vm3 = vcmask 64512
    %4 = vst.msk [vmem:[#allocation0] sm:$0x1] %vm3, %v2
    %s5 = scalar_lea.vmem %s0, 15
    %v6 = vld [vmem:[%s5] sm:$0x1]
    %7 = vrot.lane.b32.xlu0 %v6, 120
    %v8 = vpop.permute.xlu0 %7
    %vm9 = vcmask 1048512
    %10 = vst.msk [vmem:[#allocation0] sm:$0x1] %vm9, %v8
    %s11 = scalar_lea.vmem %s0, 14
    %v12 = vld [vmem:[%s11] sm:$0x1]
    %13 = vrot.lane.b32.xlu0 %v12, 112
    %v14 = vpop.permute.xlu0 %13
    %vm15 = vcmask 982912
    %16 = vst.msk [vmem:[#allocation0] sm:$0x1] %vm15, %v14
    %s17 = scalar_lea.vmem %s0, 13
    %v18 = vld [vmem:[%s17] sm:$0x1]
    %19 = vrot.lane.b32.xlu0 %v18, 104
    %v20 = vpop.permute.xlu0 %19
    %vm21 = vcmask 917312
    %22 = vst.msk [vmem:[#allocation0] sm:$0x1] %vm21, %v20
    %s23 = scalar_lea.vmem %s0, 12
    %v24 = vld [vmem:[%s23] sm:$0x1]
    %25 = vrot.lane.b32.xlu0 %v24, 96
    %v26 = vpop.permute.xlu0 %25
    %vm27 = vcmask 851712
    %28 = vst.msk [vmem:[#allocation0] sm:$0x1] %vm27, %v26
    %s29 = scalar_lea.vmem %s0, 11
    %v30 = vld [vmem:[%s29] sm:$0x1]
    %31 = vrot.lane.b32.xlu0 %v30, 88
    %v32 = vpop.permute.xlu0 %31
    %vm33 = vcmask 786112
    %34 = vst.msk [vmem:[#allocation0] sm:$0x1] %vm33, %v32
    %s35 = scalar_lea.vmem %s0, 10
    %v36 = vld [vmem:[%s35] sm:$0x1]
    %37 = vrot.lane.b32.xlu0 %v36, 80
    %v38 = vpop.permute.xlu0 %37
    %vm39 = vcmask 720512
    %40 = vst.msk [vmem:[#allocation0] sm:$0x1] %vm39, %v38
    %s41 = scalar_lea.vmem %s0, 9
    %v42 = vld [vmem:[%s41] sm:$0x1]
    %43 = vrot.lane.b32.xlu0 %v42, 72
    %v44 = vpop.permute.xlu0 %43
    %vm45 = vcmask 654912
    %46 = vst.msk [vmem:[#allocation0] sm:$0x1] %vm45, %v44
    %s47 = scalar_lea.vmem %s0, 8
    %v48 = vld [vmem:[%s47] sm:$0x1]
    %49 = vrot.lane.b32.xlu0 %v48, 64
    %v50 = vpop.permute.xlu0 %49
    %vm51 = vcmask 589312
    %52 = vst.msk [vmem:[#allocation0] sm:$0x1] %vm51, %v50
    %s53 = scalar_lea.vmem %s0, 7
    %v54 = vld [vmem:[%s53] sm:$0x1]
    %55 = vrot.lane.b32.xlu0 %v54, 56
    %v56 = vpop.permute.xlu0 %55
    %vm57 = vcmask 523712
    %58 = vst.msk [vmem:[#allocation0] sm:$0x1] %vm57, %v56
    %s59 = scalar_lea.vmem %s0, 6
    %v60 = vld [vmem:[%s59] sm:$0x1]
    %61 = vrot.lane.b32.xlu0 %v60, 48
    %v62 = vpop.permute.xlu0 %61
    %vm63 = vcmask 458112
    %64 = vst.msk [vmem:[#allocation0] sm:$0x1] %vm63, %v62
    %s65 = scalar_lea.vmem %s0, 5
    %v66 = vld [vmem:[%s65] sm:$0x1]
    %67 = vrot.lane.b32.xlu0 %v66, 40
    %v68 = vpop.permute.xlu0 %67
    %vm69 = vcmask 392512
    %70 = vst.msk [vmem:[#allocation0] sm:$0x1] %vm69, %v68
    %s71 = scalar_lea.vmem %s0, 4
    %v72 = vld [vmem:[%s71] sm:$0x1]
    %73 = vrot.lane.b32.xlu0 %v72, 32
    %v74 = vpop.permute.xlu0 %73
    %vm75 = vcmask 326912
    %76 = vst.msk [vmem:[#allocation0] sm:$0x1] %vm75, %v74
    %s77 = scalar_lea.vmem %s0, 3
    %v78 = vld [vmem:[%s77] sm:$0x1]
    %79 = vrot.lane.b32.xlu0 %v78, 24
    %v80 = vpop.permute.xlu0 %79
    %vm81 = vcmask 261312
    %82 = vst.msk [vmem:[#allocation0] sm:$0x1] %vm81, %v80
    %s83 = scalar_lea.vmem %s0, 2
    %v84 = vld [vmem:[%s83] sm:$0x1]
    %85 = vrot.lane.b32.xlu0 %v84, 16
    %v86 = vpop.permute.xlu0 %85
    %vm87 = vcmask 195712
    %88 = vst.msk [vmem:[#allocation0] sm:$0x1] %vm87, %v86
    %s89 = scalar_lea.vmem %s0, 1
    %v90 = vld [vmem:[%s89] sm:$0x1]
    %91 = vrot.lane.b32.xlu0 %v90, 8
    %v92 = vpop.permute.xlu0 %91
    %vm93 = vcmask 130112
    %94 = vst.msk [vmem:[#allocation0] sm:$0x1] %vm93, %v92
    %s96 = sshllo.u32 0, 1
    %v98 = vld [vmem:[#allocation0] sm:%s96]
    %s99 = sshllo.u32 0, 1
    %100 = vst [vmem:[%s1] sm:%s99] %v98

// kernel: double_dilated_conv.1
$region0: #{double_dilated_conv.1}
  #allocation0 [shape = 'u32[]', space=smem, size = 0x4, offset = 0x4, fixed_abs, tag = 'smem constant byte address 0x4 - core index']
  #allocation1 [shape = 'u32[144,128]{1,0:T(1,128)}', space=vmem, size = 0x12000, scoped, tag = 'internal scratch']
  #allocation2 [shape = 'bf16[2,20,128]{2,1,0:T(8,128)(2,1)}', space=vmem, size = 0x3000, scoped, tag = 'scratch operand']
  %s0 = inlined_call_operand.vmem [shape: f32[2,20,64], index: 0, kind: input, shape index: {}]
  %s1 = inlined_call_operand.vmem [shape: bf16[3,64,128], index: 1, kind: input, shape index: {}]
  %s2 = inlined_call_operand.vmem [shape: bf16[3,128,128], index: 2, kind: input, shape index: {}]
  %s3 = inlined_call_operand.vmem [shape: f32[1,128], index: 3, kind: input, shape index: {}]
  %s4 = inlined_call_operand.vmem [shape: f32[1,128], index: 4, kind: input, shape index: {}]
  %s5 = inlined_call_operand.vmem [shape: f32[1,128], index: 5, kind: input, shape index: {}]
  %s6 = inlined_call_operand.vmem [shape: f32[1,128], index: 6, kind: input, shape index: {}]
  %s7 = inlined_call_operand.vmem [shape: f32[32,128], index: 7, kind: output, shape index: {}]
  %s8 = sld [smem:[#allocation0]]
  $region38: #{double_dilated_conv.1} parent=0
    _
  %s10 = ssub.s32 1, %s8
  %s11 = scalar_select 0, %s10, %s8
  // Predicated region
  $region2: #{double_dilated_conv.1} parent=0 // pred_check
    _
  $region3: #{double_dilated_conv.1} parent=0 // pred_check_branch
    %13 = sbr.rel (0) target = $region5
  $region4: #{double_dilated_conv.1} parent=0 // pred_region
    _
  $region5: #{double_dilated_conv.1} parent=0 // pred_fallthru
    _
  // Predicated region
  $region6: #{double_dilated_conv.1} parent=0 // pred_check
    _
  $region7: #{double_dilated_conv.1} parent=0 // pred_check_branch
    %15 = sbr.rel (0) target = $region9
  $region8: #{double_dilated_conv.1} parent=0 // pred_region
    _
  $region9: #{double_dilated_conv.1} parent=0 // pred_fallthru
    _
  // Predicated region
  $region10: #{double_dilated_conv.1} parent=0 // pred_check
    _
  $region11: #{double_dilated_conv.1} parent=0 // pred_check_branch
    %17 = sbr.rel (0) target = $region13
  $region12: #{double_dilated_conv.1} parent=0 // pred_region
    _
  $region13: #{double_dilated_conv.1} parent=0 // pred_fallthru
    _
  // Predicated region
  $region14: #{double_dilated_conv.1} parent=0 // pred_check
    _
  $region15: #{double_dilated_conv.1} parent=0 // pred_check_branch
    %19 = sbr.rel (0) target = $region17
  $region16: #{double_dilated_conv.1} parent=0 // pred_region
    _
  $region17: #{double_dilated_conv.1} parent=0 // pred_fallthru
    _
  // Predicated region
  $region18: #{double_dilated_conv.1} parent=0 // pred_check
    _
  $region19: #{double_dilated_conv.1} parent=0 // pred_check_branch
    %21 = sbr.rel (0) target = $region21
  $region20: #{double_dilated_conv.1} parent=0 // pred_region
    _
  $region21: #{double_dilated_conv.1} parent=0 // pred_fallthru
    _
  // Predicated region
  $region22: #{double_dilated_conv.1} parent=0 // pred_check
    _
  $region23: #{double_dilated_conv.1} parent=0 // pred_check_branch
    %23 = sbr.rel (0) target = $region25
  $region24: #{double_dilated_conv.1} parent=0 // pred_region
    _
  $region25: #{double_dilated_conv.1} parent=0 // pred_fallthru
    _
  // Predicated region
  $region26: #{double_dilated_conv.1} parent=0 // pred_check
    _
  $region27: #{double_dilated_conv.1} parent=0 // pred_check_branch
    %25 = sbr.rel (0) target = $region29
  $region28: #{double_dilated_conv.1} parent=0 // pred_region
    _
  $region29: #{double_dilated_conv.1} parent=0 // pred_fallthru
    _
  %v27 = vld [vmem:[%s0] sm:$0xff]
  %v28 = vld [vmem:[%s0 + $0x8] sm:$0xff]
  %v29 = vld [vmem:[%s0 + $0x18] sm:$0xff]
  %v30 = vld [vmem:[%s0 + $0x20] sm:$0xff]
  %v31 = vpack.c.bf16 %v28, %v27
  %v32 = vpack.c.bf16 %v30, %v29
  %v33 = vld [vmem:[%s1] sm:$0xf]
  %v34 = vld [vmem:[%s1 + $0x4] sm:$0xf]
  %v35 = vld [vmem:[%s1 + $0x8] sm:$0xf]
  %v36 = vld [vmem:[%s1 + $0xc] sm:$0xf]
  %v37 = vld [vmem:[%s1 + $0x10] sm:$0xf]
  %v38 = vld [vmem:[%s1 + $0x14] sm:$0xf]
  %v39 = vld [vmem:[%s1 + $0x18] sm:$0xf]
  %v40 = vld [vmem:[%s1 + $0x1c] sm:$0xf]
  %v41 = vld [vmem:[%s0 + $0x2] sm:$0xff]
  %v42 = vld [vmem:[%s0 + $0xa] sm:$0xff]
  %v43 = vld [vmem:[%s0 + $0x1a] sm:$0xff]
  %v44 = vld [vmem:[%s0 + $0x22] sm:$0xff]
  %v45 = vpack.c.bf16 %v42, %v41
  %v46 = vpack.c.bf16 %v44, %v43
  %s47 = scalar_lea.vmem %s1, 32
  %v48 = vld [vmem:[%s47] sm:$0xf]
  %v49 = vld [vmem:[%s47 + $0x4] sm:$0xf]
  %v50 = vld [vmem:[%s47 + $0x8] sm:$0xf]
  %v51 = vld [vmem:[%s47 + $0xc] sm:$0xf]
  %v52 = vld [vmem:[%s47 + $0x10] sm:$0xf]
  %v53 = vld [vmem:[%s47 + $0x14] sm:$0xf]
  %v54 = vld [vmem:[%s47 + $0x18] sm:$0xf]
  %v55 = vld [vmem:[%s47 + $0x1c] sm:$0xf]
  %v64 = vunpack.c.l.b16 %v48
  %v65 = vunpack.c.l.b16 %v49
  %v66 = vunpack.c.l.b16 %v50
  %v67 = vunpack.c.l.b16 %v51
  %v68 = vunpack.c.l.b16 %v52
  %v69 = vunpack.c.l.b16 %v53
  %v70 = vunpack.c.l.b16 %v54
  %v71 = vunpack.c.l.b16 %v55
  %v72 = vpack.c.b16 %v65, %v64
  %v73 = vpack.c.b16 %v67, %v66
  %v74 = vpack.c.b16 %v69, %v68
  %v75 = vpack.c.b16 %v71, %v70
  %vm80 = vcmask 523264
  %v82 = vsel %vm80, %v45, 0
  %v85 = vsel %vm80, %v46, 0
  %87 = vmatprep.subr.bf16.mxu0 0
  %88 = vmatpush1.bf16.msra.mxu0 %v72
  %89 = vmatprep.subr.bf16.mxu0 0
  %90 = vmatpush1.bf16.msra.mxu0 %v73
  %91 = vmatprep.subr.bf16.mxu0 0
  %92 = vmatpush1.bf16.msra.mxu0 %v74
  %93 = vmatprep.subr.bf16.mxu0 0
  %94 = vmatpush1.bf16.msra.mxu0 %v75
  %95 = vmatprep.subr.bf16.mxu0 0
  %96 = vmatpush1.bf16.msra.mxu0 0
  %97 = vmatprep.subr.bf16.mxu0 0
  %98 = vmatpush1.bf16.msra.mxu0 0
  %99 = vmatprep.subr.bf16.mxu0 0
  %100 = vmatpush1.bf16.msra.mxu0 0
  %101 = vmatprep.subr.bf16.mxu0 0
  %102 = vmatpush1.bf16.msra.mxu0 0
  %103 = vmatprep.subr.bf16.mxu0 0
  %104 = vmatpush1.bf16.msra.mxu0 0
  %105 = vmatprep.subr.bf16.mxu0 0
  %106 = vmatpush1.bf16.msra.mxu0 0
  %107 = vmatprep.subr.bf16.mxu0 0
  %108 = vmatpush1.bf16.msra.mxu0 0
  %109 = vmatprep.subr.bf16.mxu0 0
  %110 = vmatpush1.bf16.msra.mxu0 0
  %111 = vmatprep.subr.bf16.mxu0 0
  %112 = vmatpush1.bf16.msra.mxu0 0
  %113 = vmatprep.subr.bf16.mxu0 0
  %114 = vmatpush1.bf16.msra.mxu0 0
  %115 = vmatprep.subr.bf16.mxu0 0
  %116 = vmatpush1.bf16.msra.mxu0 0
  %117 = vmatprep.subr.bf16.mxu0 0
  %118 = vmatpush1.bf16.msra.mxu0 0
  %119 = vmatprep.mubr.bf16.mxu0 0
  %120 = vmatmul.mubr.bf16.gmra.mrb[0].mxu0 %v82
  %v121 = vpop.f32.mrb[0].mxu0
  %v122 = vadd.f32 0.0, %v121
  %v123 = vpop.f32.mrb[0].mxu0
  %v124 = vpop.f32.mrb[0].mxu0
  %v125 = vadd.f32 0.0, %v124
  %v126 = vpop.f32.mrb[0].mxu0
  %127 = vmatprep.mubr.bf16.mxu0 0
  %128 = vmatmul.mubr.bf16.gmra.mrb[0].mxu0 %v85
  %v129 = vpop.f32.mrb[0].mxu0
  %v130 = vadd.f32 0.0, %v129
  %v131 = vpop.f32.mrb[0].mxu0
  %v132 = vpop.f32.mrb[0].mxu0
  %v133 = vadd.f32 0.0, %v132
  %v134 = vpop.f32.mrb[0].mxu0
  %135 = vdwg.mxu0
  %v144 = vunpack.c.l.b16 %v33
  %v145 = vunpack.c.l.b16 %v34
  %v146 = vunpack.c.l.b16 %v35
  %v147 = vunpack.c.l.b16 %v36
  %v148 = vunpack.c.l.b16 %v37
  %v149 = vunpack.c.l.b16 %v38
  %v150 = vunpack.c.l.b16 %v39
  %v151 = vunpack.c.l.b16 %v40
  %v152 = vpack.c.b16 %v145, %v144
  %v153 = vpack.c.b16 %v147, %v146
  %v154 = vpack.c.b16 %v149, %v148
  %v155 = vpack.c.b16 %v151, %v150
  %v161 = vsel %vm80, %v31, 0
  %v164 = vsel %vm80, %v32, 0
  %166 = vmatprep.subr.bf16.mxu0 0
  %167 = vmatpush1.bf16.msra.mxu0 %v152
  %168 = vmatprep.subr.bf16.mxu0 0
  %169 = vmatpush1.bf16.msra.mxu0 %v153
  %170 = vmatprep.subr.bf16.mxu0 0
  %171 = vmatpush1.bf16.msra.mxu0 %v154
  %172 = vmatprep.subr.bf16.mxu0 0
  %173 = vmatpush1.bf16.msra.mxu0 %v155
  %174 = vmatprep.subr.bf16.mxu0 0
  %175 = vmatpush1.bf16.msra.mxu0 0
  %176 = vmatprep.subr.bf16.mxu0 0
  %177 = vmatpush1.bf16.msra.mxu0 0
  %178 = vmatprep.subr.bf16.mxu0 0
  %179 = vmatpush1.bf16.msra.mxu0 0
  %180 = vmatprep.subr.bf16.mxu0 0
  %181 = vmatpush1.bf16.msra.mxu0 0
  %182 = vmatprep.subr.bf16.mxu0 0
  %183 = vmatpush1.bf16.msra.mxu0 0
  %184 = vmatprep.subr.bf16.mxu0 0
  %185 = vmatpush1.bf16.msra.mxu0 0
  %186 = vmatprep.subr.bf16.mxu0 0
  %187 = vmatpush1.bf16.msra.mxu0 0
  %188 = vmatprep.subr.bf16.mxu0 0
  %189 = vmatpush1.bf16.msra.mxu0 0
  %190 = vmatprep.subr.bf16.mxu0 0
  %191 = vmatpush1.bf16.msra.mxu0 0
  %192 = vmatprep.subr.bf16.mxu0 0
  %193 = vmatpush1.bf16.msra.mxu0 0
  %194 = vmatprep.subr.bf16.mxu0 0
  %195 = vmatpush1.bf16.msra.mxu0 0
  %196 = vmatprep.subr.bf16.mxu0 0
  %197 = vmatpush1.bf16.msra.mxu0 0
  %198 = vmatprep.mubr.bf16.mxu0 0
  %199 = vmatmul.mubr.bf16.gmra.mrb[0].mxu0 %v161
  %v200 = vpop.f32.mrb[0].mxu0
  %v201 = vadd.f32 %v122, %v200
  %v202 = vpop.f32.mrb[0].mxu0
  %v203 = vpop.f32.mrb[0].mxu0
  %v204 = vadd.f32 %v125, %v203
  %v205 = vpop.f32.mrb[0].mxu0
  %206 = vmatprep.mubr.bf16.mxu0 0
  %207 = vmatmul.mubr.bf16.gmra.mrb[0].mxu0 %v164
  %v208 = vpop.f32.mrb[0].mxu0
  %v209 = vadd.f32 %v130, %v208
  %v210 = vpop.f32.mrb[0].mxu0
  %v211 = vpop.f32.mrb[0].mxu0
  %v212 = vadd.f32 %v133, %v211
  %v213 = vpop.f32.mrb[0].mxu0
  %214 = vdwg.mxu0
  %v215 = vld [vmem:[%s0 + $0x4] sm:$0xff]
  %v216 = vld [vmem:[%s0 + $0xc] sm:$0xff]
  %v217 = vld [vmem:[%s0 + $0x1c] sm:$0xff]
  %v218 = vld [vmem:[%s0 + $0x24] sm:$0xff]
  %v219 = vpack.c.bf16 %v216, %v215
  %v220 = vpack.c.bf16 %v218, %v217
  %s221 = scalar_lea.vmem %s1, 64
  %v222 = vld [vmem:[%s221] sm:$0xf]
  %v223 = vld [vmem:[%s221 + $0x4] sm:$0xf]
  %v224 = vld [vmem:[%s221 + $0x8] sm:$0xf]
  %v225 = vld [vmem:[%s221 + $0xc] sm:$0xf]
  %v226 = vld [vmem:[%s221 + $0x10] sm:$0xf]
  %v227 = vld [vmem:[%s221 + $0x14] sm:$0xf]
  %v228 = vld [vmem:[%s221 + $0x18] sm:$0xf]
  %v229 = vld [vmem:[%s221 + $0x1c] sm:$0xf]
  %v238 = vunpack.c.l.b16 %v222
  %v239 = vunpack.c.l.b16 %v223
  %v240 = vunpack.c.l.b16 %v224
  %v241 = vunpack.c.l.b16 %v225
  %v242 = vunpack.c.l.b16 %v226
  %v243 = vunpack.c.l.b16 %v227
  %v244 = vunpack.c.l.b16 %v228
  %v245 = vunpack.c.l.b16 %v229
  %v246 = vpack.c.b16 %v239, %v238
  %v247 = vpack.c.b16 %v241, %v240
  %v248 = vpack.c.b16 %v243, %v242
  %v249 = vpack.c.b16 %v245, %v244
  %v255 = vsel %vm80, %v219, 0
  %v258 = vsel %vm80, %v220, 0
  %260 = vmatprep.subr.bf16.mxu0 0
  %261 = vmatpush1.bf16.msra.mxu0 %v246
  %262 = vmatprep.subr.bf16.mxu0 0
  %263 = vmatpush1.bf16.msra.mxu0 %v247
  %264 = vmatprep.subr.bf16.mxu0 0
  %265 = vmatpush1.bf16.msra.mxu0 %v248
  %266 = vmatprep.subr.bf16.mxu0 0
  %267 = vmatpush1.bf16.msra.mxu0 %v249
  %268 = vmatprep.subr.bf16.mxu0 0
  %269 = vmatpush1.bf16.msra.mxu0 0
  %270 = vmatprep.subr.bf16.mxu0 0
  %271 = vmatpush1.bf16.msra.mxu0 0
  %272 = vmatprep.subr.bf16.mxu0 0
  %273 = vmatpush1.bf16.msra.mxu0 0
  %274 = vmatprep.subr.bf16.mxu0 0
  %275 = vmatpush1.bf16.msra.mxu0 0
  %276 = vmatprep.subr.bf16.mxu0 0
  %277 = vmatpush1.bf16.msra.mxu0 0
  %278 = vmatprep.subr.bf16.mxu0 0
  %279 = vmatpush1.bf16.msra.mxu0 0
  %280 = vmatprep.subr.bf16.mxu0 0
  %281 = vmatpush1.bf16.msra.mxu0 0
  %282 = vmatprep.subr.bf16.mxu0 0
  %283 = vmatpush1.bf16.msra.mxu0 0
  %284 = vmatprep.subr.bf16.mxu0 0
  %285 = vmatpush1.bf16.msra.mxu0 0
  %286 = vmatprep.subr.bf16.mxu0 0
  %287 = vmatpush1.bf16.msra.mxu0 0
  %288 = vmatprep.subr.bf16.mxu0 0
  %289 = vmatpush1.bf16.msra.mxu0 0
  %290 = vmatprep.subr.bf16.mxu0 0
  %291 = vmatpush1.bf16.msra.mxu0 0
  %292 = vmatprep.mubr.bf16.mxu0 0
  %293 = vmatmul.mubr.bf16.gmra.mrb[0].mxu0 %v255
  %v294 = vpop.f32.mrb[0].mxu0
  %v295 = vadd.f32 0.0, %v294
  %v296 = vpop.f32.mrb[0].mxu0
  %v297 = vpop.f32.mrb[0].mxu0
  %v298 = vadd.f32 0.0, %v297
  %v299 = vpop.f32.mrb[0].mxu0
  %300 = vmatprep.mubr.bf16.mxu0 0
  %301 = vmatmul.mubr.bf16.gmra.mrb[0].mxu0 %v258
  %v302 = vpop.f32.mrb[0].mxu0
  %v303 = vadd.f32 0.0, %v302
  %v304 = vpop.f32.mrb[0].mxu0
  %v305 = vpop.f32.mrb[0].mxu0
  %v306 = vadd.f32 0.0, %v305
  %v307 = vpop.f32.mrb[0].mxu0
  %308 = vdwg.mxu0
  %v309 = vadd.f32 %v201, %v295
  %v310 = vadd.f32 %v204, %v298
  %v311 = vadd.f32 %v209, %v303
  %v312 = vadd.f32 %v212, %v306
  %v313 = vld [vmem:[%s3] sm:$0x1]
  %v314 = vld [vmem:[%s4] sm:$0x1]
  %v315 = vlaneseq
  %v316 = vshrl.u32 %v315, 7
  %v317 = vadd.s32 %v316, 8
  %v318 = vadd.s32 %v316, 16
  %v319 = vadd.s32 %v316, 24
  %v320 = vadd.s32 %v316, 32
  %v321 = vadd.s32 %v316, 40
  %v322 = vadd.s32 %v316, 48
  %v323 = vadd.s32 %v316, 56
  %v324 = vadd.s32 %v316, 64
  %v325 = vadd.s32 %v316, 72
  %v326 = vadd.s32 %v316, 80
  %v327 = vadd.s32 %v316, 88
  %v328 = vadd.s32 %v316, 96
  %v329 = vadd.s32 %v316, 104
  %v330 = vadd.s32 %v316, 112
  %v331 = vadd.s32 %v316, 120
  %v332 = vlaneseq
  %v333 = vand.u32 %v332, 127
  %vm334 = vcmp.lt.s32.totalorder %v316, 0
  %v335 = vsub.s32 0, %v316
  %v336 = vsel %vm334, %v335, %v316
  %v337 = vshrl.u32 %v336, 3
  %v338 = vand.u32 %v336, 7
  %v339 = vsub.s32 0, %v338
  %v340 = vsel %vm334, %v339, %v338
  %vm341 = vcmp.lt.s32.totalorder %v317, 0
  %v342 = vsub.s32 0, %v317
  %v343 = vsel %vm341, %v342, %v317
  %v344 = vshrl.u32 %v343, 3
  %v345 = vand.u32 %v343, 7
  %v346 = vsub.s32 0, %v345
  %v347 = vsel %vm341, %v346, %v345
  %vm348 = vcmp.lt.s32.totalorder %v318, 0
  %v349 = vsub.s32 0, %v318
  %v350 = vsel %vm348, %v349, %v318
  %v351 = vshrl.u32 %v350, 3
  %v352 = vand.u32 %v350, 7
  %v353 = vsub.s32 0, %v352
  %v354 = vsel %vm348, %v353, %v352
  %vm355 = vcmp.lt.s32.totalorder %v319, 0
  %v356 = vsub.s32 0, %v319
  %v357 = vsel %vm355, %v356, %v319
  %v358 = vshrl.u32 %v357, 3
  %v359 = vand.u32 %v357, 7
  %v360 = vsub.s32 0, %v359
  %v361 = vsel %vm355, %v360, %v359
  %vm362 = vcmp.lt.s32.totalorder %v320, 0
  %v363 = vsub.s32 0, %v320
  %v364 = vsel %vm362, %v363, %v320
  %v365 = vshrl.u32 %v364, 3
  %v366 = vand.u32 %v364, 7
  %v367 = vsub.s32 0, %v366
  %v368 = vsel %vm362, %v367, %v366
  %vm369 = vcmp.lt.s32.totalorder %v321, 0
  %v370 = vsub.s32 0, %v321
  %v371 = vsel %vm369, %v370, %v321
  %v372 = vshrl.u32 %v371, 3
  %v373 = vand.u32 %v371, 7
  %v374 = vsub.s32 0, %v373
  %v375 = vsel %vm369, %v374, %v373
  %vm376 = vcmp.lt.s32.totalorder %v322, 0
  %v377 = vsub.s32 0, %v322
  %v378 = vsel %vm376, %v377, %v322
  %v379 = vshrl.u32 %v378, 3
  %v380 = vand.u32 %v378, 7
  %v381 = vsub.s32 0, %v380
  %v382 = vsel %vm376, %v381, %v380
  %vm383 = vcmp.lt.s32.totalorder %v323, 0
  %v384 = vsub.s32 0, %v323
  %v385 = vsel %vm383, %v384, %v323
  %v386 = vshrl.u32 %v385, 3
  %v387 = vand.u32 %v385, 7
  %v388 = vsub.s32 0, %v387
  %v389 = vsel %vm383, %v388, %v387
  %vm390 = vcmp.lt.s32.totalorder %v324, 0
  %v391 = vsub.s32 0, %v324
  %v392 = vsel %vm390, %v391, %v324
  %v393 = vshrl.u32 %v392, 3
  %v394 = vand.u32 %v392, 7
  %v395 = vsub.s32 0, %v394
  %v396 = vsel %vm390, %v395, %v394
  %vm397 = vcmp.lt.s32.totalorder %v325, 0
  %v398 = vsub.s32 0, %v325
  %v399 = vsel %vm397, %v398, %v325
  %v400 = vshrl.u32 %v399, 3
  %v401 = vand.u32 %v399, 7
  %v402 = vsub.s32 0, %v401
  %v403 = vsel %vm397, %v402, %v401
  %vm404 = vcmp.lt.s32.totalorder %v326, 0
  %v405 = vsub.s32 0, %v326
  %v406 = vsel %vm404, %v405, %v326
  %v407 = vshrl.u32 %v406, 3
  %v408 = vand.u32 %v406, 7
  %v409 = vsub.s32 0, %v408
  %v410 = vsel %vm404, %v409, %v408
  %vm411 = vcmp.lt.s32.totalorder %v327, 0
  %v412 = vsub.s32 0, %v327
  %v413 = vsel %vm411, %v412, %v327
  %v414 = vshrl.u32 %v413, 3
  %v415 = vand.u32 %v413, 7
  %v416 = vsub.s32 0, %v415
  %v417 = vsel %vm411, %v416, %v415
  %vm418 = vcmp.lt.s32.totalorder %v328, 0
  %v419 = vsub.s32 0, %v328
  %v420 = vsel %vm418, %v419, %v328
  %v421 = vshrl.u32 %v420, 3
  %v422 = vand.u32 %v420, 7
  %v423 = vsub.s32 0, %v422
  %v424 = vsel %vm418, %v423, %v422
  %vm425 = vcmp.lt.s32.totalorder %v329, 0
  %v426 = vsub.s32 0, %v329
  %v427 = vsel %vm425, %v426, %v329
  %v428 = vshrl.u32 %v427, 3
  %v429 = vand.u32 %v427, 7
  %v430 = vsub.s32 0, %v429
  %v431 = vsel %vm425, %v430, %v429
  %vm432 = vcmp.lt.s32.totalorder %v330, 0
  %v433 = vsub.s32 0, %v330
  %v434 = vsel %vm432, %v433, %v330
  %v435 = vshrl.u32 %v434, 3
  %v436 = vand.u32 %v434, 7
  %v437 = vsub.s32 0, %v436
  %v438 = vsel %vm432, %v437, %v436
  %vm439 = vcmp.lt.s32.totalorder %v331, 0
  %v440 = vsub.s32 0, %v331
  %v441 = vsel %vm439, %v440, %v331
  %v442 = vshrl.u32 %v441, 3
  %v443 = vand.u32 %v441, 7
  %v444 = vsub.s32 0, %v443
  %v445 = vsel %vm439, %v444, %v443
  %vm446 = vcmp.ne.s32.totalorder %v340, 0
  %vm447 = vcmp.ne.s32.totalorder %v347, 0
  %vm448 = vcmp.ne.s32.totalorder %v354, 0
  %vm449 = vcmp.ne.s32.totalorder %v361, 0
  %vm450 = vcmp.ne.s32.totalorder %v368, 0
  %vm451 = vcmp.ne.s32.totalorder %v375, 0
  %vm452 = vcmp.ne.s32.totalorder %v382, 0
  %vm453 = vcmp.ne.s32.totalorder %v389, 0
  %vm454 = vcmp.ne.s32.totalorder %v396, 0
  %vm455 = vcmp.ne.s32.totalorder %v403, 0
  %vm456 = vcmp.ne.s32.totalorder %v410, 0
  %vm457 = vcmp.ne.s32.totalorder %v417, 0
  %vm458 = vcmp.ne.s32.totalorder %v424, 0
  %vm459 = vcmp.ne.s32.totalorder %v431, 0
  %vm460 = vcmp.ne.s32.totalorder %v438, 0
  %vm461 = vcmp.ne.s32.totalorder %v445, 0
  %vm462 = vcmp.lt.s32.totalorder %v340, 0
  %vm463 = vcmp.lt.s32.totalorder %v347, 0
  %vm464 = vcmp.lt.s32.totalorder %v354, 0
  %vm465 = vcmp.lt.s32.totalorder %v361, 0
  %vm466 = vcmp.lt.s32.totalorder %v368, 0
  %vm467 = vcmp.lt.s32.totalorder %v375, 0
  %vm468 = vcmp.lt.s32.totalorder %v382, 0
  %vm469 = vcmp.lt.s32.totalorder %v389, 0
  %vm470 = vcmp.lt.s32.totalorder %v396, 0
  %vm471 = vcmp.lt.s32.totalorder %v403, 0
  %vm472 = vcmp.lt.s32.totalorder %v410, 0
  %vm473 = vcmp.lt.s32.totalorder %v417, 0
  %vm474 = vcmp.lt.s32.totalorder %v424, 0
  %vm475 = vcmp.lt.s32.totalorder %v431, 0
  %vm476 = vcmp.lt.s32.totalorder %v438, 0
  %vm477 = vcmp.lt.s32.totalorder %v445, 0
  %vm478 = vmand %vm462, %vm446
  %vm479 = vmand %vm463, %vm447
  %vm480 = vmand %vm464, %vm448
  %vm481 = vmand %vm465, %vm449
  %vm482 = vmand %vm466, %vm450
  %vm483 = vmand %vm467, %vm451
  %vm484 = vmand %vm468, %vm452
  %vm485 = vmand %vm469, %vm453
  %vm486 = vmand %vm470, %vm454
  %vm487 = vmand %vm471, %vm455
  %vm488 = vmand %vm472, %vm456
  %vm489 = vmand %vm473, %vm457
  %vm490 = vmand %vm474, %vm458
  %vm491 = vmand %vm475, %vm459
  %vm492 = vmand %vm476, %vm460
  %vm493 = vmand %vm477, %vm461
  %v494 = vadd.s32 %v340, 8
  %v495 = vadd.s32 %v347, 8
  %v496 = vadd.s32 %v354, 8
  %v497 = vadd.s32 %v361, 8
  %v498 = vadd.s32 %v368, 8
  %v499 = vadd.s32 %v375, 8
  %v500 = vadd.s32 %v382, 8
  %v501 = vadd.s32 %v389, 8
  %v502 = vadd.s32 %v396, 8
  %v503 = vadd.s32 %v403, 8
  %v504 = vadd.s32 %v410, 8
  %v505 = vadd.s32 %v417, 8
  %v506 = vadd.s32 %v424, 8
  %v507 = vadd.s32 %v431, 8
  %v508 = vadd.s32 %v438, 8
  %v509 = vadd.s32 %v445, 8
  %v510 = vsel %vm478, %v494, %v340
  %v511 = vsel %vm479, %v495, %v347
  %v512 = vsel %vm480, %v496, %v354
  %v513 = vsel %vm481, %v497, %v361
  %v514 = vsel %vm482, %v498, %v368
  %v515 = vsel %vm483, %v499, %v375
  %v516 = vsel %vm484, %v500, %v382
  %v517 = vsel %vm485, %v501, %v389
  %v518 = vsel %vm486, %v502, %v396
  %v519 = vsel %vm487, %v503, %v403
  %v520 = vsel %vm488, %v504, %v410
  %v521 = vsel %vm489, %v505, %v417
  %v522 = vsel %vm490, %v506, %v424
  %v523 = vsel %vm491, %v507, %v431
  %v524 = vsel %vm492, %v508, %v438
  %v525 = vsel %vm493, %v509, %v445
  %vm526 = vcmp.lt.s32.totalorder %v333, 0
  %v527 = vsub.s32 0, %v333
  %v528 = vsel %vm526, %v527, %v333
  %v529 = vshrl.u32 %v528, 3
  %v530 = vand.u32 %v528, 7
  %v531 = vsub.s32 0, %v530
  %v532 = vsel %vm526, %v531, %v530
  %vm533 = vcmp.ne.s32.totalorder %v532, 0
  %vm534 = vcmp.lt.s32.totalorder %v532, 0
  %vm535 = vmand %vm534, %vm533
  %v536 = vadd.s32 %v532, 8
  %v537 = vsel %vm535, %v536, %v532
  %vm538 = vcmp.eq.s32.totalorder %v510, %v537
  %vm539 = vcmp.eq.s32.totalorder %v511, %v537
  %vm540 = vcmp.eq.s32.totalorder %v512, %v537
  %vm541 = vcmp.eq.s32.totalorder %v513, %v537
  %vm542 = vcmp.eq.s32.totalorder %v514, %v537
  %vm543 = vcmp.eq.s32.totalorder %v515, %v537
  %vm544 = vcmp.eq.s32.totalorder %v516, %v537
  %vm545 = vcmp.eq.s32.totalorder %v517, %v537
  %vm546 = vcmp.eq.s32.totalorder %v518, %v537
  %vm547 = vcmp.eq.s32.totalorder %v519, %v537
  %vm548 = vcmp.eq.s32.totalorder %v520, %v537
  %vm549 = vcmp.eq.s32.totalorder %v521, %v537
  %vm550 = vcmp.eq.s32.totalorder %v522, %v537
  %vm551 = vcmp.eq.s32.totalorder %v523, %v537
  %vm552 = vcmp.eq.s32.totalorder %v524, %v537
  %vm553 = vcmp.eq.s32.totalorder %v525, %v537
  %v554 = vsel %vm538, 1, 0
  %v555 = vsel %vm539, 1, 0
  %v556 = vsel %vm540, 1, 0
  %v557 = vsel %vm541, 1, 0
  %v558 = vsel %vm542, 1, 0
  %v559 = vsel %vm543, 1, 0
  %v560 = vsel %vm544, 1, 0
  %v561 = vsel %vm545, 1, 0
  %v562 = vsel %vm546, 1, 0
  %v563 = vsel %vm547, 1, 0
  %v564 = vsel %vm548, 1, 0
  %v565 = vsel %vm549, 1, 0
  %v566 = vsel %vm550, 1, 0
  %v567 = vsel %vm551, 1, 0
  %v568 = vsel %vm552, 1, 0
  %v569 = vsel %vm553, 1, 0
  %v570 = vcvt.s32.f32 %v554
  %v571 = vcvt.s32.f32 %v555
  %v572 = vcvt.s32.f32 %v556
  %v573 = vcvt.s32.f32 %v557
  %v574 = vcvt.s32.f32 %v558
  %v575 = vcvt.s32.f32 %v559
  %v576 = vcvt.s32.f32 %v560
  %v577 = vcvt.s32.f32 %v561
  %v578 = vcvt.s32.f32 %v562
  %v579 = vcvt.s32.f32 %v563
  %v580 = vcvt.s32.f32 %v564
  %v581 = vcvt.s32.f32 %v565
  %v582 = vcvt.s32.f32 %v566
  %v583 = vcvt.s32.f32 %v567
  %v584 = vcvt.s32.f32 %v568
  %v585 = vcvt.s32.f32 %v569
  %v586 = vadd.f32 %v309, %v310
  %v587 = vadd.f32 %v586, %v311
  %v588 = vadd.f32 %v587, %v312
  %v589 = vrot.slane %v588, 4
  %v590 = vadd.f32 %v588, %v589
  %v591 = vrot.slane %v590, 2
  %v592 = vadd.f32 %v590, %v591
  %v593 = vrot.slane %v592, 1
  %v594 = vadd.f32 %v592, %v593
  %v595 = vmul.f32 %v309, %v309
  %v596 = vmul.f32 %v310, %v310
  %v597 = vmul.f32 %v311, %v311
  %v598 = vmul.f32 %v312, %v312
  %v599 = vadd.f32 %v595, %v596
  %v600 = vadd.f32 %v599, %v597
  %v601 = vadd.f32 %v600, %v598
  %v602 = vrot.slane %v601, 4
  %v603 = vadd.f32 %v601, %v602
  %v604 = vrot.slane %v603, 2
  %v605 = vadd.f32 %v603, %v604
  %v606 = vrot.slane %v605, 1
  %v607 = vadd.f32 %v605, %v606
  %608 = vmatprep.subr.mxu0 0.0
  %609 = vmatpush1.msra.mxu0 %v570
  %610 = vmatprep.subr.mxu0 0.0
  %611 = vmatpush1.msra.mxu0 %v571
  %612 = vmatprep.subr.mxu0 0.0
  %613 = vmatpush1.msra.mxu0 %v572
  %614 = vmatprep.subr.mxu0 0.0
  %615 = vmatpush1.msra.mxu0 %v573
  %616 = vmatprep.subr.mxu0 0.0
  %617 = vmatpush1.msra.mxu0 %v574
  %618 = vmatprep.subr.mxu0 0.0
  %619 = vmatpush1.msra.mxu0 %v575
  %620 = vmatprep.subr.mxu0 0.0
  %621 = vmatpush1.msra.mxu0 %v576
  %622 = vmatprep.subr.mxu0 0.0
  %623 = vmatpush1.msra.mxu0 %v577
  %624 = vmatprep.subr.mxu0 0.0
  %625 = vmatpush1.msra.mxu0 %v578
  %626 = vmatprep.subr.mxu0 0.0
  %627 = vmatpush1.msra.mxu0 %v579
  %628 = vmatprep.subr.mxu0 0.0
  %629 = vmatpush1.msra.mxu0 %v580
  %630 = vmatprep.subr.mxu0 0.0
  %631 = vmatpush1.msra.mxu0 %v581
  %632 = vmatprep.subr.mxu0 0.0
  %633 = vmatpush1.msra.mxu0 %v582
  %634 = vmatprep.subr.mxu0 0.0
  %635 = vmatpush1.msra.mxu0 %v583
  %636 = vmatprep.subr.mxu0 0.0
  %637 = vmatpush1.msra.mxu0 %v584
  %638 = vmatprep.subr.mxu0 0.0
  %639 = vmatpush1.msra.mxu0 %v585
  %640 = vmatprep.subr.mxu0 0.0
  %641 = vmatpush1.msra.mxu0 0.0
  %642 = vmatprep.subr.mxu0 0.0
  %643 = vmatpush1.msra.mxu0 0.0
  %644 = vmatprep.subr.mxu0 0.0
  %645 = vmatpush1.msra.mxu0 0.0
  %646 = vmatprep.subr.mxu0 0.0
  %647 = vmatpush1.msra.mxu0 0.0
  %648 = vmatprep.subr.mxu0 0.0
  %649 = vmatpush1.msra.mxu0 0.0
  %650 = vmatprep.subr.mxu0 0.0
  %651 = vmatpush1.msra.mxu0 0.0
  %652 = vmatprep.subr.mxu0 0.0
  %653 = vmatpush1.msra.mxu0 0.0
  %654 = vmatprep.subr.mxu0 0.0
  %655 = vmatpush1.msra.mxu0 0.0
  %656 = vmatprep.subr.mxu0 0.0
  %657 = vmatpush1.msra.mxu0 0.0
  %658 = vmatprep.subr.mxu0 0.0
  %659 = vmatpush1.msra.mxu0 0.0
  %660 = vmatprep.subr.mxu0 0.0
  %661 = vmatpush1.msra.mxu0 0.0
  %662 = vmatprep.subr.mxu0 0.0
  %663 = vmatpush1.msra.mxu0 0.0
  %664 = vmatprep.subr.mxu0 0.0
  %665 = vmatpush1.msra.mxu0 0.0
  %666 = vmatprep.subr.mxu0 0.0
  %667 = vmatpush1.msra.mxu0 0.0
  %668 = vmatprep.subr.mxu0 0.0
  %669 = vmatpush1.msra.mxu0 0.0
  %670 = vmatprep.subr.mxu0 0.0
  %671 = vmatpush1.msra.mxu0 0.0
  %672 = vmatprep.mubr.f32.mxu0 0.0
  %673 = vmatmul.mubr.f32.gmra.mrb[0].mxu0 %v594
  %v674 = vpop.f32.mrb[0].mxu0
  %v675 = vadd.f32 0.0, %v674
  %v676 = vpop.f32.mrb[0].mxu0
  %677 = vdwg.mxu0
  %v678 = vmul.f32 %v675, 0.001953125
  %679 = vmatprep.subr.mxu0 0.0
  %680 = vmatpush1.msra.mxu0 %v570
  %681 = vmatprep.subr.mxu0 0.0
  %682 = vmatpush1.msra.mxu0 %v571
  %683 = vmatprep.subr.mxu0 0.0
  %684 = vmatpush1.msra.mxu0 %v572
  %685 = vmatprep.subr.mxu0 0.0
  %686 = vmatpush1.msra.mxu0 %v573
  %687 = vmatprep.subr.mxu0 0.0
  %688 = vmatpush1.msra.mxu0 %v574
  %689 = vmatprep.subr.mxu0 0.0
  %690 = vmatpush1.msra.mxu0 %v575
  %691 = vmatprep.subr.mxu0 0.0
  %692 = vmatpush1.msra.mxu0 %v576
  %693 = vmatprep.subr.mxu0 0.0
  %694 = vmatpush1.msra.mxu0 %v577
  %695 = vmatprep.subr.mxu0 0.0
  %696 = vmatpush1.msra.mxu0 %v578
  %697 = vmatprep.subr.mxu0 0.0
  %698 = vmatpush1.msra.mxu0 %v579
  %699 = vmatprep.subr.mxu0 0.0
  %700 = vmatpush1.msra.mxu0 %v580
  %701 = vmatprep.subr.mxu0 0.0
  %702 = vmatpush1.msra.mxu0 %v581
  %703 = vmatprep.subr.mxu0 0.0
  %704 = vmatpush1.msra.mxu0 %v582
  %705 = vmatprep.subr.mxu0 0.0
  %706 = vmatpush1.msra.mxu0 %v583
  %707 = vmatprep.subr.mxu0 0.0
  %708 = vmatpush1.msra.mxu0 %v584
  %709 = vmatprep.subr.mxu0 0.0
  %710 = vmatpush1.msra.mxu0 %v585
  %711 = vmatprep.subr.mxu0 0.0
  %712 = vmatpush1.msra.mxu0 0.0
  %713 = vmatprep.subr.mxu0 0.0
  %714 = vmatpush1.msra.mxu0 0.0
  %715 = vmatprep.subr.mxu0 0.0
  %716 = vmatpush1.msra.mxu0 0.0
  %717 = vmatprep.subr.mxu0 0.0
  %718 = vmatpush1.msra.mxu0 0.0
  %719 = vmatprep.subr.mxu0 0.0
  %720 = vmatpush1.msra.mxu0 0.0
  %721 = vmatprep.subr.mxu0 0.0
  %722 = vmatpush1.msra.mxu0 0.0
  %723 = vmatprep.subr.mxu0 0.0
  %724 = vmatpush1.msra.mxu0 0.0
  %725 = vmatprep.subr.mxu0 0.0
  %726 = vmatpush1.msra.mxu0 0.0
  %727 = vmatprep.subr.mxu0 0.0
  %728 = vmatpush1.msra.mxu0 0.0
  %729 = vmatprep.subr.mxu0 0.0
  %730 = vmatpush1.msra.mxu0 0.0
  %731 = vmatprep.subr.mxu0 0.0
  %732 = vmatpush1.msra.mxu0 0.0
  %733 = vmatprep.subr.mxu0 0.0
  %734 = vmatpush1.msra.mxu0 0.0
  %735 = vmatprep.subr.mxu0 0.0
  %736 = vmatpush1.msra.mxu0 0.0
  %737 = vmatprep.subr.mxu0 0.0
  %738 = vmatpush1.msra.mxu0 0.0
  %739 = vmatprep.subr.mxu0 0.0
  %740 = vmatpush1.msra.mxu0 0.0
  %741 = vmatprep.subr.mxu0 0.0
  %742 = vmatpush1.msra.mxu0 0.0
  %743 = vmatprep.mubr.f32.mxu0 0.0
  %744 = vmatmul.mubr.f32.gmra.mrb[0].mxu0 %v607
  %v745 = vpop.f32.mrb[0].mxu0
  %v746 = vadd.f32 0.0, %v745
  %v747 = vpop.f32.mrb[0].mxu0
  %748 = vdwg.mxu0
  %v749 = vmul.f32 %v746, 0.001953125
  %v750 = vmul.f32 %v678, %v678
  %v751 = vsub.f32 %v749, %v750
  %v752 = vmax.f32 %v751, 0.0
  %v753 = vlaneseq
  %v754 = vshrl.u32 %v753, 7
  %v755 = vsub.s32 0, %v754
  %v756 = vrot.slane %v678, %v755
  %v757 = vsub.f32 %v309, %v756
  %v758 = vsub.f32 %v310, %v756
  %v759 = vsub.f32 %v311, %v756
  %v760 = vsub.f32 %v312, %v756
  %v761 = vadd.f32 %v752, 1e-05
  %v762 = vrsqrt.pop %v761
  %v763 = vlaneseq
  %v764 = vshrl.u32 %v763, 7
  %v765 = vsub.s32 0, %v764
  %v766 = vrot.slane %v762, %v765
  %v767 = vmul.f32 %v757, %v766
  %v768 = vmul.f32 %v758, %v766
  %v769 = vmul.f32 %v759, %v766
  %v770 = vmul.f32 %v760, %v766
  %v772 = vlaneseq
  %v773 = vshrl.u32 %v772, 7
  %v774 = vsub.s32 0, %v773
  %v775 = vrot.slane %v313, %v774
  %v777 = vmul.f32 %v767, %v775
  %v778 = vmul.f32 %v768, %v775
  %v779 = vmul.f32 %v769, %v775
  %v780 = vmul.f32 %v770, %v775
  %v782 = vlaneseq
  %v783 = vshrl.u32 %v782, 7
  %v784 = vsub.s32 0, %v783
  %v785 = vrot.slane %v314, %v784
  %v787 = vadd.f32 %v777, %v785
  %v788 = vadd.f32 %v778, %v785
  %v789 = vadd.f32 %v779, %v785
  %v790 = vadd.f32 %v780, %v785
  %vm791 = vcmp.gt.f32.partialorder %v787, 0.0
  %vm792 = vcmp.gt.f32.partialorder %v788, 0.0
  %vm793 = vcmp.gt.f32.partialorder %v789, 0.0
  %vm794 = vcmp.gt.f32.partialorder %v790, 0.0
  %v795 = vmul.f32 %v787, 0.2
  %v796 = vmul.f32 %v788, 0.2
  %v797 = vmul.f32 %v789, 0.2
  %v798 = vmul.f32 %v790, 0.2
  %v799 = vsel %vm791, %v787, %v795
  %v800 = vsel %vm792, %v788, %v796
  %v801 = vsel %vm793, %v789, %v797
  %v802 = vsel %vm794, %v790, %v798
  %803 = vst [vmem:[#allocation2] sm:$0x1] 0
  %804 = vst [vmem:[#allocation2 + $0xc] sm:$0x1] 0
  %805 = vst [vmem:[#allocation2 + $0x8] sm:$0x2] 0
  %806 = vst [vmem:[#allocation2 + $0x14] sm:$0x2] 0
  %v807 = vpack.c.bf16 %v800, %v799
  %v808 = vpack.c.bf16 %v802, %v801
  %v811 = vunpack.c.l.b16 %v807
  %v812 = vunpack.c.h.b16 %v807
  %v813 = vunpack.c.l.b16 %v808
  %v814 = vunpack.c.h.b16 %v808
  %v815 = vpack.c.b16 %v811, %v811
  %v816 = vpack.c.b16 %v812, %v812
  %v817 = vpack.c.b16 %v813, %v813
  %v818 = vpack.c.b16 %v814, %v814
  %vm819 = vcmask 1040384
  %vm820 = vcmask 1044484
  %vm821 = vmor %vm819, %vm820
  %v822 = vrot.slane %v815, 7
  %v823 = vrot.slane %v822, 4
  %v824 = vrot.slane %v816, 7
  %v825 = vsel %vm821, %v823, %v824
  %v826 = vrot.slane %v824, 4
  %v827 = vrot.slane %v817, 7
  %v828 = vrot.slane %v827, 4
  %v829 = vrot.slane %v818, 7
  %v830 = vsel %vm821, %v828, %v829
  %v831 = vrot.slane %v829, 4
  %838 = vst [vmem:[#allocation2] sm:$0xe] %v822
  %839 = vst [vmem:[#allocation2 + $0x4] sm:$0xf] %v825
  %840 = vst [vmem:[#allocation2 + $0x8] sm:$0x1] %v826
  %841 = vst [vmem:[#allocation2 + $0xc] sm:$0xe] %v827
  %842 = vst [vmem:[#allocation2 + $0x10] sm:$0xf] %v830
  %843 = vst [vmem:[#allocation2 + $0x14] sm:$0x1] %v831
  %v844 = vld [vmem:[#allocation2] sm:$0xf]
  %v845 = vld [vmem:[#allocation2 + $0x4] sm:$0xf]
  %v846 = vld [vmem:[#allocation2 + $0xc] sm:$0xf]
  %v847 = vld [vmem:[#allocation2 + $0x10] sm:$0xf]
  %v848 = vld [vmem:[%s2] sm:$0xf]
  %v849 = vld [vmem:[%s2 + $0x4] sm:$0xf]
  %v850 = vld [vmem:[%s2 + $0x8] sm:$0xf]
  %v851 = vld [vmem:[%s2 + $0xc] sm:$0xf]
  %v852 = vld [vmem:[%s2 + $0x10] sm:$0xf]
  %v853 = vld [vmem:[%s2 + $0x14] sm:$0xf]
  %v854 = vld [vmem:[%s2 + $0x18] sm:$0xf]
  %v855 = vld [vmem:[%s2 + $0x1c] sm:$0xf]
  %v856 = vld [vmem:[%s2 + $0x20] sm:$0xf]
  %v857 = vld [vmem:[%s2 + $0x24] sm:$0xf]
  %v858 = vld [vmem:[%s2 + $0x28] sm:$0xf]
  %v859 = vld [vmem:[%s2 + $0x2c] sm:$0xf]
  %v860 = vld [vmem:[%s2 + $0x30] sm:$0xf]
  %v861 = vld [vmem:[%s2 + $0x34] sm:$0xf]
  %v862 = vld [vmem:[%s2 + $0x38] sm:$0xf]
  %v863 = vld [vmem:[%s2 + $0x3c] sm:$0xf]
  %v864 = vld [vmem:[#allocation2] sm:$0xe]
  %v865 = vld [vmem:[#allocation2 + $0x8] sm:$0x1]
  %v866 = vld [vmem:[#allocation2 + $0xc] sm:$0xe]
  %v867 = vld [vmem:[#allocation2 + $0x14] sm:$0x1]
  %vm874 = vcmask 1042432
  %vm875 = vcmask 1046532
  %vm876 = vmor %vm874, %vm875
  %v877 = vrot.slane %v864, 5
  %v878 = vrot.slane %v877, 4
  %v879 = vrot.slane %v845, 5
  %v880 = vsel %vm876, %v878, %v879
  %v881 = vrot.slane %v879, 4
  %v882 = vrot.slane %v865, 5
  %v883 = vsel %vm876, %v881, %v882
  %v884 = vrot.slane %v866, 5
  %v885 = vrot.slane %v884, 4
  %v886 = vrot.slane %v847, 5
  %v887 = vsel %vm876, %v885, %v886
  %v888 = vrot.slane %v886, 4
  %v889 = vrot.slane %v867, 5
  %v890 = vsel %vm876, %v888, %v889
  %s891 = scalar_lea.vmem %s2, 64
  %v892 = vld [vmem:[%s891] sm:$0xf]
  %v893 = vld [vmem:[%s891 + $0x4] sm:$0xf]
  %v894 = vld [vmem:[%s891 + $0x8] sm:$0xf]
  %v895 = vld [vmem:[%s891 + $0xc] sm:$0xf]
  %v896 = vld [vmem:[%s891 + $0x10] sm:$0xf]
  %v897 = vld [vmem:[%s891 + $0x14] sm:$0xf]
  %v898 = vld [vmem:[%s891 + $0x18] sm:$0xf]
  %v899 = vld [vmem:[%s891 + $0x1c] sm:$0xf]
  %v900 = vld [vmem:[%s891 + $0x20] sm:$0xf]
  %v901 = vld [vmem:[%s891 + $0x24] sm:$0xf]
  %v902 = vld [vmem:[%s891 + $0x28] sm:$0xf]
  %v903 = vld [vmem:[%s891 + $0x2c] sm:$0xf]
  %v904 = vld [vmem:[%s891 + $0x30] sm:$0xf]
  %v905 = vld [vmem:[%s891 + $0x34] sm:$0xf]
  %v906 = vld [vmem:[%s891 + $0x38] sm:$0xf]
  %v907 = vld [vmem:[%s891 + $0x3c] sm:$0xf]
  %v908 = vunpack.c.l.b16 %v880
  %v909 = vunpack.c.l.b16 %v883
  %v910 = vunpack.c.l.b16 %v887
  %v911 = vunpack.c.l.b16 %v890
  %v912 = vpack.c.b16 %v909, %v908
  %v913 = vpack.c.b16 %v911, %v910
  %v932 = vunpack.c.l.b16 %v892
  %v933 = vunpack.c.l.b16 %v893
  %v934 = vunpack.c.l.b16 %v894
  %v935 = vunpack.c.l.b16 %v895
  %v936 = vunpack.c.l.b16 %v896
  %v937 = vunpack.c.l.b16 %v897
  %v938 = vunpack.c.l.b16 %v898
  %v939 = vunpack.c.l.b16 %v899
  %v940 = vunpack.c.l.b16 %v900
  %v941 = vunpack.c.l.b16 %v901
  %v942 = vunpack.c.l.b16 %v902
  %v943 = vunpack.c.l.b16 %v903
  %v944 = vunpack.c.l.b16 %v904
  %v945 = vunpack.c.l.b16 %v905
  %v946 = vunpack.c.l.b16 %v906
  %v947 = vunpack.c.l.b16 %v907
  %v948 = vpack.c.b16 %v933, %v932
  %v949 = vpack.c.b16 %v935, %v934
  %v950 = vpack.c.b16 %v937, %v936
  %v951 = vpack.c.b16 %v939, %v938
  %v952 = vpack.c.b16 %v941, %v940
  %v953 = vpack.c.b16 %v943, %v942
  %v954 = vpack.c.b16 %v945, %v944
  %v955 = vpack.c.b16 %v947, %v946
  %964 = vmatprep.subr.bf16.mxu0 0
  %965 = vmatpush1.bf16.msra.mxu0 %v948
  %966 = vmatprep.subr.bf16.mxu0 0
  %967 = vmatpush1.bf16.msra.mxu0 %v949
  %968 = vmatprep.subr.bf16.mxu0 0
  %969 = vmatpush1.bf16.msra.mxu0 %v950
  %970 = vmatprep.subr.bf16.mxu0 0
  %971 = vmatpush1.bf16.msra.mxu0 %v951
  %972 = vmatprep.subr.bf16.mxu0 0
  %973 = vmatpush1.bf16.msra.mxu0 %v952
  %974 = vmatprep.subr.bf16.mxu0 0
  %975 = vmatpush1.bf16.msra.mxu0 %v953
  %976 = vmatprep.subr.bf16.mxu0 0
  %977 = vmatpush1.bf16.msra.mxu0 %v954
  %978 = vmatprep.subr.bf16.mxu0 0
  %979 = vmatpush1.bf16.msra.mxu0 %v955
  %980 = vmatprep.subr.bf16.mxu0 0
  %981 = vmatpush1.bf16.msra.mxu0 0
  %982 = vmatprep.subr.bf16.mxu0 0
  %983 = vmatpush1.bf16.msra.mxu0 0
  %984 = vmatprep.subr.bf16.mxu0 0
  %985 = vmatpush1.bf16.msra.mxu0 0
  %986 = vmatprep.subr.bf16.mxu0 0
  %987 = vmatpush1.bf16.msra.mxu0 0
  %988 = vmatprep.subr.bf16.mxu0 0
  %989 = vmatpush1.bf16.msra.mxu0 0
  %990 = vmatprep.subr.bf16.mxu0 0
  %991 = vmatpush1.bf16.msra.mxu0 0
  %992 = vmatprep.subr.bf16.mxu0 0
  %993 = vmatpush1.bf16.msra.mxu0 0
  %994 = vmatprep.subr.bf16.mxu0 0
  %995 = vmatpush1.bf16.msra.mxu0 0
  %996 = vmatprep.mubr.bf16.mxu0 0
  %997 = vmatmul.mubr.bf16.gmra.mrb[0].mxu0 %v912
  %v998 = vpop.f32.mrb[0].mxu0
  %v999 = vadd.f32 0.0, %v998
  %v1000 = vpop.f32.mrb[0].mxu0
  %v1001 = vpop.f32.mrb[0].mxu0
  %v1002 = vadd.f32 0.0, %v1001
  %v1003 = vpop.f32.mrb[0].mxu0
  %1004 = vmatprep.mubr.bf16.mxu0 0
  %1005 = vmatmul.mubr.bf16.gmra.mrb[0].mxu0 %v913
  %v1006 = vpop.f32.mrb[0].mxu0
  %v1007 = vadd.f32 0.0, %v1006
  %v1008 = vpop.f32.mrb[0].mxu0
  %v1009 = vpop.f32.mrb[0].mxu0
  %v1010 = vadd.f32 0.0, %v1009
  %v1011 = vpop.f32.mrb[0].mxu0
  %1012 = vdwg.mxu0
  %v1015 = vunpack.c.l.b16 %v844
  %v1016 = vunpack.c.l.b16 %v845
  %v1017 = vunpack.c.l.b16 %v846
  %v1018 = vunpack.c.l.b16 %v847
  %v1019 = vpack.c.b16 %v1016, %v1015
  %v1020 = vpack.c.b16 %v1018, %v1017
  %v1039 = vunpack.c.l.b16 %v848
  %v1040 = vunpack.c.l.b16 %v849
  %v1041 = vunpack.c.l.b16 %v850
  %v1042 = vunpack.c.l.b16 %v851
  %v1043 = vunpack.c.l.b16 %v852
  %v1044 = vunpack.c.l.b16 %v853
  %v1045 = vunpack.c.l.b16 %v854
  %v1046 = vunpack.c.l.b16 %v855
  %v1047 = vunpack.c.l.b16 %v856
  %v1048 = vunpack.c.l.b16 %v857
  %v1049 = vunpack.c.l.b16 %v858
  %v1050 = vunpack.c.l.b16 %v859
  %v1051 = vunpack.c.l.b16 %v860
  %v1052 = vunpack.c.l.b16 %v861
  %v1053 = vunpack.c.l.b16 %v862
  %v1054 = vunpack.c.l.b16 %v863
  %v1055 = vpack.c.b16 %v1040, %v1039
  %v1056 = vpack.c.b16 %v1042, %v1041
  %v1057 = vpack.c.b16 %v1044, %v1043
  %v1058 = vpack.c.b16 %v1046, %v1045
  %v1059 = vpack.c.b16 %v1048, %v1047
  %v1060 = vpack.c.b16 %v1050, %v1049
  %v1061 = vpack.c.b16 %v1052, %v1051
  %v1062 = vpack.c.b16 %v1054, %v1053
  %1071 = vmatprep.subr.bf16.mxu0 0
  %1072 = vmatpush1.bf16.msra.mxu0 %v1055
  %1073 = vmatprep.subr.bf16.mxu0 0
  %1074 = vmatpush1.bf16.msra.mxu0 %v1056
  %1075 = vmatprep.subr.bf16.mxu0 0
  %1076 = vmatpush1.bf16.msra.mxu0 %v1057
  %1077 = vmatprep.subr.bf16.mxu0 0
  %1078 = vmatpush1.bf16.msra.mxu0 %v1058
  %1079 = vmatprep.subr.bf16.mxu0 0
  %1080 = vmatpush1.bf16.msra.mxu0 %v1059
  %1081 = vmatprep.subr.bf16.mxu0 0
  %1082 = vmatpush1.bf16.msra.mxu0 %v1060
  %1083 = vmatprep.subr.bf16.mxu0 0
  %1084 = vmatpush1.bf16.msra.mxu0 %v1061
  %1085 = vmatprep.subr.bf16.mxu0 0
  %1086 = vmatpush1.bf16.msra.mxu0 %v1062
  %1087 = vmatprep.subr.bf16.mxu0 0
  %1088 = vmatpush1.bf16.msra.mxu0 0
  %1089 = vmatprep.subr.bf16.mxu0 0
  %1090 = vmatpush1.bf16.msra.mxu0 0
  %1091 = vmatprep.subr.bf16.mxu0 0
  %1092 = vmatpush1.bf16.msra.mxu0 0
  %1093 = vmatprep.subr.bf16.mxu0 0
  %1094 = vmatpush1.bf16.msra.mxu0 0
  %1095 = vmatprep.subr.bf16.mxu0 0
  %1096 = vmatpush1.bf16.msra.mxu0 0
  %1097 = vmatprep.subr.bf16.mxu0 0
  %1098 = vmatpush1.bf16.msra.mxu0 0
  %1099 = vmatprep.subr.bf16.mxu0 0
  %1100 = vmatpush1.bf16.msra.mxu0 0
  %1101 = vmatprep.subr.bf16.mxu0 0
  %1102 = vmatpush1.bf16.msra.mxu0 0
  %1103 = vmatprep.mubr.bf16.mxu0 0
  %1104 = vmatmul.mubr.bf16.gmra.mrb[0].mxu0 %v1019
  %v1105 = vpop.f32.mrb[0].mxu0
  %v1106 = vadd.f32 %v999, %v1105
  %v1107 = vpop.f32.mrb[0].mxu0
  %v1108 = vpop.f32.mrb[0].mxu0
  %v1109 = vadd.f32 %v1002, %v1108
  %v1110 = vpop.f32.mrb[0].mxu0
  %1111 = vmatprep.mubr.bf16.mxu0 0
  %1112 = vmatmul.mubr.bf16.gmra.mrb[0].mxu0 %v1020
  %v1113 = vpop.f32.mrb[0].mxu0
  %v1114 = vadd.f32 %v1007, %v1113
  %v1115 = vpop.f32.mrb[0].mxu0
  %v1116 = vpop.f32.mrb[0].mxu0
  %v1117 = vadd.f32 %v1010, %v1116
  %v1118 = vpop.f32.mrb[0].mxu0
  %1119 = vdwg.mxu0
  %v1120 = vld [vmem:[#allocation2] sm:$0xc]
  %v1121 = vld [vmem:[#allocation2 + $0x8] sm:$0x3]
  %v1122 = vld [vmem:[#allocation2 + $0xc] sm:$0xc]
  %v1123 = vld [vmem:[#allocation2 + $0x14] sm:$0x3]
  %vm1128 = vcmask 1041408
  %vm1129 = vcmask 1045508
  %vm1130 = vmor %vm1128, %vm1129
  %v1131 = vrot.slane %v1120, 6
  %v1132 = vrot.slane %v1131, 4
  %v1133 = vrot.slane %v845, 6
  %v1134 = vsel %vm1130, %v1132, %v1133
  %v1135 = vrot.slane %v1133, 4
  %v1136 = vrot.slane %v1121, 6
  %v1137 = vsel %vm1130, %v1135, %v1136
  %v1138 = vrot.slane %v1122, 6
  %v1139 = vrot.slane %v1138, 4
  %v1140 = vrot.slane %v847, 6
  %v1141 = vsel %vm1130, %v1139, %v1140
  %v1142 = vrot.slane %v1140, 4
  %v1143 = vrot.slane %v1123, 6
  %v1144 = vsel %vm1130, %v1142, %v1143
  %s1145 = scalar_lea.vmem %s2, 128
  %v1146 = vld [vmem:[%s1145] sm:$0xf]
  %v1147 = vld [vmem:[%s1145 + $0x4] sm:$0xf]
  %v1148 = vld [vmem:[%s1145 + $0x8] sm:$0xf]
  %v1149 = vld [vmem:[%s1145 + $0xc] sm:$0xf]
  %v1150 = vld [vmem:[%s1145 + $0x10] sm:$0xf]
  %v1151 = vld [vmem:[%s1145 + $0x14] sm:$0xf]
  %v1152 = vld [vmem:[%s1145 + $0x18] sm:$0xf]
  %v1153 = vld [vmem:[%s1145 + $0x1c] sm:$0xf]
  %v1154 = vld [vmem:[%s1145 + $0x20] sm:$0xf]
  %v1155 = vld [vmem:[%s1145 + $0x24] sm:$0xf]
  %v1156 = vld [vmem:[%s1145 + $0x28] sm:$0xf]
  %v1157 = vld [vmem:[%s1145 + $0x2c] sm:$0xf]
  %v1158 = vld [vmem:[%s1145 + $0x30] sm:$0xf]
  %v1159 = vld [vmem:[%s1145 + $0x34] sm:$0xf]
  %v1160 = vld [vmem:[%s1145 + $0x38] sm:$0xf]
  %v1161 = vld [vmem:[%s1145 + $0x3c] sm:$0xf]
  %v1162 = vunpack.c.l.b16 %v1134
  %v1163 = vunpack.c.l.b16 %v1137
  %v1164 = vunpack.c.l.b16 %v1141
  %v1165 = vunpack.c.l.b16 %v1144
  %v1166 = vpack.c.b16 %v1163, %v1162
  %v1167 = vpack.c.b16 %v1165, %v1164
  %v1186 = vunpack.c.l.b16 %v1146
  %v1187 = vunpack.c.l.b16 %v1147
  %v1188 = vunpack.c.l.b16 %v1148
  %v1189 = vunpack.c.l.b16 %v1149
  %v1190 = vunpack.c.l.b16 %v1150
  %v1191 = vunpack.c.l.b16 %v1151
  %v1192 = vunpack.c.l.b16 %v1152
  %v1193 = vunpack.c.l.b16 %v1153
  %v1194 = vunpack.c.l.b16 %v1154
  %v1195 = vunpack.c.l.b16 %v1155
  %v1196 = vunpack.c.l.b16 %v1156
  %v1197 = vunpack.c.l.b16 %v1157
  %v1198 = vunpack.c.l.b16 %v1158
  %v1199 = vunpack.c.l.b16 %v1159
  %v1200 = vunpack.c.l.b16 %v1160
  %v1201 = vunpack.c.l.b16 %v1161
  %v1202 = vpack.c.b16 %v1187, %v1186
  %v1203 = vpack.c.b16 %v1189, %v1188
  %v1204 = vpack.c.b16 %v1191, %v1190
  %v1205 = vpack.c.b16 %v1193, %v1192
  %v1206 = vpack.c.b16 %v1195, %v1194
  %v1207 = vpack.c.b16 %v1197, %v1196
  %v1208 = vpack.c.b16 %v1199, %v1198
  %v1209 = vpack.c.b16 %v1201, %v1200
  %1218 = vmatprep.subr.bf16.mxu0 0
  %1219 = vmatpush1.bf16.msra.mxu0 %v1202
  %1220 = vmatprep.subr.bf16.mxu0 0
  %1221 = vmatpush1.bf16.msra.mxu0 %v1203
  %1222 = vmatprep.subr.bf16.mxu0 0
  %1223 = vmatpush1.bf16.msra.mxu0 %v1204
  %1224 = vmatprep.subr.bf16.mxu0 0
  %1225 = vmatpush1.bf16.msra.mxu0 %v1205
  %1226 = vmatprep.subr.bf16.mxu0 0
  %1227 = vmatpush1.bf16.msra.mxu0 %v1206
  %1228 = vmatprep.subr.bf16.mxu0 0
  %1229 = vmatpush1.bf16.msra.mxu0 %v1207
  %1230 = vmatprep.subr.bf16.mxu0 0
  %1231 = vmatpush1.bf16.msra.mxu0 %v1208
  %1232 = vmatprep.subr.bf16.mxu0 0
  %1233 = vmatpush1.bf16.msra.mxu0 %v1209
  %1234 = vmatprep.subr.bf16.mxu0 0
  %1235 = vmatpush1.bf16.msra.mxu0 0
  %1236 = vmatprep.subr.bf16.mxu0 0
  %1237 = vmatpush1.bf16.msra.mxu0 0
  %1238 = vmatprep.subr.bf16.mxu0 0
  %1239 = vmatpush1.bf16.msra.mxu0 0
  %1240 = vmatprep.subr.bf16.mxu0 0
  %1241 = vmatpush1.bf16.msra.mxu0 0
  %1242 = vmatprep.subr.bf16.mxu0 0
  %1243 = vmatpush1.bf16.msra.mxu0 0
  %1244 = vmatprep.subr.bf16.mxu0 0
  %1245 = vmatpush1.bf16.msra.mxu0 0
  %1246 = vmatprep.subr.bf16.mxu0 0
  %1247 = vmatpush1.bf16.msra.mxu0 0
  %1248 = vmatprep.subr.bf16.mxu0 0
  %1249 = vmatpush1.bf16.msra.mxu0 0
  %1250 = vmatprep.mubr.bf16.mxu0 0
  %1251 = vmatmul.mubr.bf16.gmra.mrb[0].mxu0 %v1166
  %v1252 = vpop.f32.mrb[0].mxu0
  %v1253 = vadd.f32 0.0, %v1252
  %v1254 = vpop.f32.mrb[0].mxu0
  %v1255 = vpop.f32.mrb[0].mxu0
  %v1256 = vadd.f32 0.0, %v1255
  %v1257 = vpop.f32.mrb[0].mxu0
  %1258 = vmatprep.mubr.bf16.mxu0 0
  %1259 = vmatmul.mubr.bf16.gmra.mrb[0].mxu0 %v1167
  %v1260 = vpop.f32.mrb[0].mxu0
  %v1261 = vadd.f32 0.0, %v1260
  %v1262 = vpop.f32.mrb[0].mxu0
  %v1263 = vpop.f32.mrb[0].mxu0
  %v1264 = vadd.f32 0.0, %v1263
  %v1265 = vpop.f32.mrb[0].mxu0
  %1266 = vdwg.mxu0
  %v1267 = vadd.f32 %v1106, %v1253
  %v1268 = vadd.f32 %v1109, %v1256
  %v1269 = vadd.f32 %v1114, %v1261
  %v1270 = vadd.f32 %v1117, %v1264
  %v1271 = vld [vmem:[%s5] sm:$0x1]
  %v1272 = vld [vmem:[%s6] sm:$0x1]
  %v1273 = vadd.f32 %v1267, %v1268
  %v1274 = vadd.f32 %v1273, %v1269
  %v1275 = vadd.f32 %v1274, %v1270
  %v1276 = vrot.slane %v1275, 4
  %v1277 = vadd.f32 %v1275, %v1276
  %v1278 = vrot.slane %v1277, 2
  %v1279 = vadd.f32 %v1277, %v1278
  %v1280 = vrot.slane %v1279, 1
  %v1281 = vadd.f32 %v1279, %v1280
  %v1282 = vmul.f32 %v1267, %v1267
  %v1283 = vmul.f32 %v1268, %v1268
  %v1284 = vmul.f32 %v1269, %v1269
  %v1285 = vmul.f32 %v1270, %v1270
  %v1286 = vadd.f32 %v1282, %v1283
  %v1287 = vadd.f32 %v1286, %v1284
  %v1288 = vadd.f32 %v1287, %v1285
  %v1289 = vrot.slane %v1288, 4
  %v1290 = vadd.f32 %v1288, %v1289
  %v1291 = vrot.slane %v1290, 2
  %v1292 = vadd.f32 %v1290, %v1291
  %v1293 = vrot.slane %v1292, 1
  %v1294 = vadd.f32 %v1292, %v1293
  %1295 = vmatprep.subr.mxu0 0.0
  %1296 = vmatpush1.msra.mxu0 %v570
  %1297 = vmatprep.subr.mxu0 0.0
  %1298 = vmatpush1.msra.mxu0 %v571
  %1299 = vmatprep.subr.mxu0 0.0
  %1300 = vmatpush1.msra.mxu0 %v572
  %1301 = vmatprep.subr.mxu0 0.0
  %1302 = vmatpush1.msra.mxu0 %v573
  %1303 = vmatprep.subr.mxu0 0.0
  %1304 = vmatpush1.msra.mxu0 %v574
  %1305 = vmatprep.subr.mxu0 0.0
  %1306 = vmatpush1.msra.mxu0 %v575
  %1307 = vmatprep.subr.mxu0 0.0
  %1308 = vmatpush1.msra.mxu0 %v576
  %1309 = vmatprep.subr.mxu0 0.0
  %1310 = vmatpush1.msra.mxu0 %v577
  %1311 = vmatprep.subr.mxu0 0.0
  %1312 = vmatpush1.msra.mxu0 %v578
  %1313 = vmatprep.subr.mxu0 0.0
  %1314 = vmatpush1.msra.mxu0 %v579
  %1315 = vmatprep.subr.mxu0 0.0
  %1316 = vmatpush1.msra.mxu0 %v580
  %1317 = vmatprep.subr.mxu0 0.0
  %1318 = vmatpush1.msra.mxu0 %v581
  %1319 = vmatprep.subr.mxu0 0.0
  %1320 = vmatpush1.msra.mxu0 %v582
  %1321 = vmatprep.subr.mxu0 0.0
  %1322 = vmatpush1.msra.mxu0 %v583
  %1323 = vmatprep.subr.mxu0 0.0
  %1324 = vmatpush1.msra.mxu0 %v584
  %1325 = vmatprep.subr.mxu0 0.0
  %1326 = vmatpush1.msra.mxu0 %v585
  %1327 = vmatprep.subr.mxu0 0.0
  %1328 = vmatpush1.msra.mxu0 0.0
  %1329 = vmatprep.subr.mxu0 0.0
  %1330 = vmatpush1.msra.mxu0 0.0
  %1331 = vmatprep.subr.mxu0 0.0
  %1332 = vmatpush1.msra.mxu0 0.0
  %1333 = vmatprep.subr.mxu0 0.0
  %1334 = vmatpush1.msra.mxu0 0.0
  %1335 = vmatprep.subr.mxu0 0.0
  %1336 = vmatpush1.msra.mxu0 0.0
  %1337 = vmatprep.subr.mxu0 0.0
  %1338 = vmatpush1.msra.mxu0 0.0
  %1339 = vmatprep.subr.mxu0 0.0
  %1340 = vmatpush1.msra.mxu0 0.0
  %1341 = vmatprep.subr.mxu0 0.0
  %1342 = vmatpush1.msra.mxu0 0.0
  %1343 = vmatprep.subr.mxu0 0.0
  %1344 = vmatpush1.msra.mxu0 0.0
  %1345 = vmatprep.subr.mxu0 0.0
  %1346 = vmatpush1.msra.mxu0 0.0
  %1347 = vmatprep.subr.mxu0 0.0
  %1348 = vmatpush1.msra.mxu0 0.0
  %1349 = vmatprep.subr.mxu0 0.0
  %1350 = vmatpush1.msra.mxu0 0.0
  %1351 = vmatprep.subr.mxu0 0.0
  %1352 = vmatpush1.msra.mxu0 0.0
  %1353 = vmatprep.subr.mxu0 0.0
  %1354 = vmatpush1.msra.mxu0 0.0
  %1355 = vmatprep.subr.mxu0 0.0
  %1356 = vmatpush1.msra.mxu0 0.0
  %1357 = vmatprep.subr.mxu0 0.0
  %1358 = vmatpush1.msra.mxu0 0.0
  %1359 = vmatprep.mubr.f32.mxu0 0.0
  %1360 = vmatmul.mubr.f32.gmra.mrb[0].mxu0 %v1281
  %v1361 = vpop.f32.mrb[0].mxu0
  %v1362 = vadd.f32 0.0, %v1361
  %v1363 = vpop.f32.mrb[0].mxu0
  %1364 = vdwg.mxu0
  %v1365 = vmul.f32 %v1362, 0.001953125
  %1366 = vmatprep.subr.mxu0 0.0
  %1367 = vmatpush1.msra.mxu0 %v570
  %1368 = vmatprep.subr.mxu0 0.0
  %1369 = vmatpush1.msra.mxu0 %v571
  %1370 = vmatprep.subr.mxu0 0.0
  %1371 = vmatpush1.msra.mxu0 %v572
  %1372 = vmatprep.subr.mxu0 0.0
  %1373 = vmatpush1.msra.mxu0 %v573
  %1374 = vmatprep.subr.mxu0 0.0
  %1375 = vmatpush1.msra.mxu0 %v574
  %1376 = vmatprep.subr.mxu0 0.0
  %1377 = vmatpush1.msra.mxu0 %v575
  %1378 = vmatprep.subr.mxu0 0.0
  %1379 = vmatpush1.msra.mxu0 %v576
  %1380 = vmatprep.subr.mxu0 0.0
  %1381 = vmatpush1.msra.mxu0 %v577
  %1382 = vmatprep.subr.mxu0 0.0
  %1383 = vmatpush1.msra.mxu0 %v578
  %1384 = vmatprep.subr.mxu0 0.0
  %1385 = vmatpush1.msra.mxu0 %v579
  %1386 = vmatprep.subr.mxu0 0.0
  %1387 = vmatpush1.msra.mxu0 %v580
  %1388 = vmatprep.subr.mxu0 0.0
  %1389 = vmatpush1.msra.mxu0 %v581
  %1390 = vmatprep.subr.mxu0 0.0
  %1391 = vmatpush1.msra.mxu0 %v582
  %1392 = vmatprep.subr.mxu0 0.0
  %1393 = vmatpush1.msra.mxu0 %v583
  %1394 = vmatprep.subr.mxu0 0.0
  %1395 = vmatpush1.msra.mxu0 %v584
  %1396 = vmatprep.subr.mxu0 0.0
  %1397 = vmatpush1.msra.mxu0 %v585
  %1398 = vmatprep.subr.mxu0 0.0
  %1399 = vmatpush1.msra.mxu0 0.0
  %1400 = vmatprep.subr.mxu0 0.0
  %1401 = vmatpush1.msra.mxu0 0.0
  %1402 = vmatprep.subr.mxu0 0.0
  %1403 = vmatpush1.msra.mxu0 0.0
  %1404 = vmatprep.subr.mxu0 0.0
  %1405 = vmatpush1.msra.mxu0 0.0
  %1406 = vmatprep.subr.mxu0 0.0
  %1407 = vmatpush1.msra.mxu0 0.0
  %1408 = vmatprep.subr.mxu0 0.0
  %1409 = vmatpush1.msra.mxu0 0.0
  %1410 = vmatprep.subr.mxu0 0.0
  %1411 = vmatpush1.msra.mxu0 0.0
  %1412 = vmatprep.subr.mxu0 0.0
  %1413 = vmatpush1.msra.mxu0 0.0
  %1414 = vmatprep.subr.mxu0 0.0
  %1415 = vmatpush1.msra.mxu0 0.0
  %1416 = vmatprep.subr.mxu0 0.0
  %1417 = vmatpush1.msra.mxu0 0.0
  %1418 = vmatprep.subr.mxu0 0.0
  %1419 = vmatpush1.msra.mxu0 0.0
  %1420 = vmatprep.subr.mxu0 0.0
  %1421 = vmatpush1.msra.mxu0 0.0
  %1422 = vmatprep.subr.mxu0 0.0
  %1423 = vmatpush1.msra.mxu0 0.0
  %1424 = vmatprep.subr.mxu0 0.0
  %1425 = vmatpush1.msra.mxu0 0.0
  %1426 = vmatprep.subr.mxu0 0.0
  %1427 = vmatpush1.msra.mxu0 0.0
  %1428 = vmatprep.subr.mxu0 0.0
  %1429 = vmatpush1.msra.mxu0 0.0
  %1430 = vmatprep.mubr.f32.mxu0 0.0
  %1431 = vmatmul.mubr.f32.gmra.mrb[0].mxu0 %v1294
  %v1432 = vpop.f32.mrb[0].mxu0
  %v1433 = vadd.f32 0.0, %v1432
  %v1434 = vpop.f32.mrb[0].mxu0
  %1435 = vdwg.mxu0
  %v1436 = vmul.f32 %v1433, 0.001953125
  %v1437 = vmul.f32 %v1365, %v1365
  %v1438 = vsub.f32 %v1436, %v1437
  %v1439 = vmax.f32 %v1438, 0.0
  %v1440 = vlaneseq
  %v1441 = vshrl.u32 %v1440, 7
  %v1442 = vsub.s32 0, %v1441
  %v1443 = vrot.slane %v1365, %v1442
  %v1444 = vsub.f32 %v1267, %v1443
  %v1445 = vsub.f32 %v1268, %v1443
  %v1446 = vsub.f32 %v1269, %v1443
  %v1447 = vsub.f32 %v1270, %v1443
  %v1448 = vadd.f32 %v1439, 1e-05
  %v1449 = vrsqrt.pop %v1448
  %v1450 = vlaneseq
  %v1451 = vshrl.u32 %v1450, 7
  %v1452 = vsub.s32 0, %v1451
  %v1453 = vrot.slane %v1449, %v1452
  %v1454 = vmul.f32 %v1444, %v1453
  %v1455 = vmul.f32 %v1445, %v1453
  %v1456 = vmul.f32 %v1446, %v1453
  %v1457 = vmul.f32 %v1447, %v1453
  %v1459 = vlaneseq
  %v1460 = vshrl.u32 %v1459, 7
  %v1461 = vsub.s32 0, %v1460
  %v1462 = vrot.slane %v1271, %v1461
  %v1464 = vmul.f32 %v1454, %v1462
  %v1465 = vmul.f32 %v1455, %v1462
  %v1466 = vmul.f32 %v1456, %v1462
  %v1467 = vmul.f32 %v1457, %v1462
  %v1469 = vlaneseq
  %v1470 = vshrl.u32 %v1469, 7
  %v1471 = vsub.s32 0, %v1470
  %v1472 = vrot.slane %v1272, %v1471
  %v1474 = vadd.f32 %v1464, %v1472
  %v1475 = vadd.f32 %v1465, %v1472
  %v1476 = vadd.f32 %v1466, %v1472
  %v1477 = vadd.f32 %v1467, %v1472
  %vm1478 = vcmp.gt.f32.partialorder %v1474, 0.0
  %vm1479 = vcmp.gt.f32.partialorder %v1475, 0.0
  %vm1480 = vcmp.gt.f32.partialorder %v1476, 0.0
  %vm1481 = vcmp.gt.f32.partialorder %v1477, 0.0
  %v1482 = vmul.f32 %v1474, 0.2
  %v1483 = vmul.f32 %v1475, 0.2
  %v1484 = vmul.f32 %v1476, 0.2
  %v1485 = vmul.f32 %v1477, 0.2
  %v1486 = vsel %vm1478, %v1474, %v1482
  %v1487 = vsel %vm1479, %v1475, %v1483
  %v1488 = vsel %vm1480, %v1476, %v1484
  %v1489 = vsel %vm1481, %v1477, %v1485
  %1490 = vst [vmem:[%s7] sm:$0xff] %v1486
  %1491 = vst [vmem:[%s7 + $0x8] sm:$0xff] %v1487
  %1492 = vst [vmem:[%s7 + $0x10] sm:$0xff] %v1488
  %1493 = vst [vmem:[%s7 + $0x18] sm:$0xff] %v1489
  // Predicated region
  $region30: #{double_dilated_conv.1} parent=0 // pred_check
    _
  $region31: #{double_dilated_conv.1} parent=0 // pred_check_branch
    %1495 = sbr.rel (0) target = $region33
  $region32: #{double_dilated_conv.1} parent=0 // pred_region
    _
  $region33: #{double_dilated_conv.1} parent=0 // pred_fallthru
    _
  // Predicated region
  $region34: #{double_dilated_conv.1} parent=0 // pred_check
    _
  $region35: #{double_dilated_conv.1} parent=0 // pred_check_branch
    %1497 = sbr.rel (0) target = $region37
  $region36: #{double_dilated_conv.1} parent=0 // pred_region
    _
  $region37: #{double_dilated_conv.1} parent=0 // pred_fallthru
    _

</llo_original>
